<compile_context>
chip_gen: v6e
topology: v6e:2x2x1
jax: 0.10.0
libtpu: 0.0.40
codegen_flags: <defaults>
</compile_context>

<pallas_src>
import jax
import jax.numpy as jnp
from jax.experimental import pallas as pl
from jax.experimental.pallas import tpu as pltpu

_EPS = 1e-5                     # nn.GroupNorm default eps
_INV_SQRT2 = 0.7071067811865476


def _round_up(x, m):
    return (x + m - 1) // m * m


# ----------------------------------------------------------------------------
# In-kernel math helpers
# ----------------------------------------------------------------------------
def _erf_approx(x):
    # Abramowitz & Stegun 7.1.26 (|err| ~ 1.5e-7): exact-GELU quality at f32.
    p = 0.3275911
    a1, a2, a3, a4, a5 = (0.254829592, -0.284496736, 1.421413741,
                          -1.453152027, 1.061405429)
    ax = jnp.abs(x)
    t = 1.0 / (1.0 + p * ax)
    poly = ((((a5 * t + a4) * t + a3) * t + a2) * t + a1) * t
    y = 1.0 - poly * jnp.exp(-ax * ax)
    return jnp.where(x >= 0.0, y, -y)


def _gelu_exact(x):
    # matches torch.nn.functional.gelu default (approximate='none')
    return 0.5 * x * (1.0 + _erf_approx(x * _INV_SQRT2))


def _group_norm1(y, gamma, beta, seg_masks, hw, n_valid_ch, ch_mask):
    """GroupNorm(num_groups=1), computed per sample.

    y:         (Cp, L) f32, L = Bt*hw (Bt samples side by side along lanes).
    seg_masks: None (Bt == 1) or list of Bt (1, L) f32 per-sample lane indicators.
    ch_mask:   None or (Cp, 1) f32 marking real (non-padded) output channels.
    """
    _, L = y.shape
    denom = float(n_valid_ch * hw)

    col_sum = jnp.sum(y, axis=0, keepdims=True)                       # (1, L)
    if seg_masks is None:
        mu_lane = jnp.sum(col_sum, axis=1, keepdims=True) / denom     # (1, 1)
    else:
        mu_lane = jnp.zeros((1, L), jnp.float32)
        for m in seg_masks:
            mu_b = jnp.sum(col_sum * m, axis=1, keepdims=True) / denom
            mu_lane = mu_lane + mu_b * m

    yc = y - mu_lane                       # reused for both variance and normalization
    if ch_mask is not None:
        yc = yc * ch_mask                  # padded channels contribute 0 to the stats

    col_sq = jnp.sum(yc * yc, axis=0, keepdims=True)                  # (1, L)
    if seg_masks is None:
        scale_lane = jax.lax.rsqrt(
            jnp.sum(col_sq, axis=1, keepdims=True) / denom + _EPS)
    else:
        scale_lane = jnp.zeros((1, L), jnp.float32)
        for m in seg_masks:
            var_b = jnp.sum(col_sq * m, axis=1, keepdims=True) / denom
            scale_lane = scale_lane + jax.lax.rsqrt(var_b + _EPS) * m

    return yc * (scale_lane * gamma) + beta


# ----------------------------------------------------------------------------
# Fused BasicBlock kernel (one grid step == one batch tile, everything in VMEM)
# ----------------------------------------------------------------------------
def _make_block_kernel(H, W, bt, planes, cout_p, has_shortcut, mxu_dtype):
    HW = H * W
    L = bt * HW

    def kernel(x_ref, w1_ref, g1_ref, b1_ref, w2_ref, g2_ref, b2_ref, *rest):
        if has_shortcut:
            ws_ref, gs_ref, bs_ref, o_ref = rest
        else:
            (o_ref,) = rest

        f32 = jnp.float32

        # --- per-lane row / col / sample indices, built in-kernel (no HBM mask input).
        #     float floor trick avoids vector integer div/mod; exact at these magnitudes.
        j = jax.lax.broadcasted_iota(jnp.int32, (1, L), 1).astype(f32)
        row_all = jnp.floor((j + 0.5) * (1.0 / W))                    # j // W
        col = j - row_all * W                                         # j %  W
        row = row_all - jnp.floor((row_all + 0.5) * (1.0 / H)) * H    # (j // W) % H

        not_top = (row >= 0.5).astype(f32)          # source row h-1 is inside the image
        not_bot = (row <= H - 1.5).astype(f32)      # source row h+1 is inside
        not_lft = (col >= 0.5).astype(f32)          # source col w-1 is inside
        not_rgt = (col <= W - 1.5).astype(f32)      # source col w+1 is inside

        def tap_mask(dh, dw):
            m = None
            for c in ((not_top if dh < 0 else not_bot if dh > 0 else None),
                      (not_lft if dw < 0 else not_rgt if dw > 0 else None)):
                if c is not None:
                    m = c if m is None else m * c
            return m                                # None for the center tap (always valid)

        tap_masks = [tap_mask(kh - 1, kw - 1) for kh in range(3) for kw in range(3)]

        if bt > 1:
            seg = jnp.floor((j + 0.5) * (1.0 / HW))                   # sample index per lane
            seg_masks = [(seg == float(b)).astype(f32) for b in range(bt)]
        else:
            seg_masks = None

        if cout_p != planes:
            ci = jax.lax.broadcasted_iota(jnp.int32, (cout_p, 1), 0)
            ch_mask = (ci < planes).astype(f32)
        else:
            ch_mask = None

        def conv3x3(xf, w_ref):
            # xf: (Cp, L) f32. w_ref: (cout_p, 9*Cp) with tap-major columns (k*Cp + ci).
            # 3x3 / stride 1 / pad 1 conv as ONE MXU matmul over a 9-tap packed operand;
            # each tap is an XLU lane rotation (pltpu.roll) + boundary mask.
            taps = []
            for kh in range(3):
                for kw in range(3):
                    d = (kh - 1) * W + (kw - 1)
                    t = xf if d == 0 else pltpu.roll(xf, (-d) % L, axis=1)
                    m = tap_masks[kh * 3 + kw]
                    if m is not None:
                        t = t * m
                    taps.append(t)
            # concat in f32 (8-sublane aligned blocks), single cast to the MXU dtype
            packed = jnp.concatenate(taps, axis=0).astype(mxu_dtype)   # (9*Cp, L)
            return jnp.dot(w_ref[...], packed, preferred_element_type=jnp.float32)

        def gnorm(y, g_ref, b_ref):
            return _group_norm1(y, g_ref[...], b_ref[...], seg_masks, HW, planes, ch_mask)

        x = x_ref[...]                           # (cin_p, L) in mxu_dtype (bf16 by default)
        xf = x.astype(f32)

        # conv1 (3x3, no bias) -> GN(1) -> relu
        h = conv3x3(xf, w1_ref)
        h = jnp.maximum(gnorm(h, g1_ref, b1_ref), 0.0)

        # conv2 (3x3, no bias) -> GN(1)
        h = conv3x3(h, w2_ref)
        h = gnorm(h, g2_ref, b2_ref)

        # shortcut: conv1x1 (no bias) -> GN(1), or identity
        if has_shortcut:
            sc = jnp.dot(ws_ref[...], x, preferred_element_type=jnp.float32)
            sc = gnorm(sc, gs_ref, bs_ref)
        else:
            sc = xf                              # requires in_planes == planes

        o_ref[...] = _gelu_exact(h + sc).astype(o_ref.dtype)

    return kernel


# ----------------------------------------------------------------------------
# Wrapper: layout plumbing (once per call) + pallas_call
# ----------------------------------------------------------------------------
def _pick_batch_tile(N, HW, max_lanes=2048):
    # Largest batch tile that keeps the lane dim a multiple of 128 (or the full array),
    # fits under max_lanes, and (when the batch allows it) leaves >= 2 parallel grid steps
    # so both v7x TensorCores get work.
    valid = [b for b in range(1, N + 1)
             if N % b == 0 and ((b * HW) % 128 == 0 or b == N)]
    fitting = [b for b in valid if b * HW <= max_lanes]
    if not fitting:
        return min(valid)
    pref = [b for b in fitting if N // b >= 2] if N >= 4 else fitting
    return max(pref or fitting)


def basic_block_pallas(x_nchw, params, *, mxu_dtype=jnp.bfloat16,
                       out_dtype=jnp.float32, max_lanes=2048):
    N, Cin, H, W = x_nchw.shape
    planes = params["w1"].shape[0]
    has_shortcut = "ws" in params
    if not has_shortcut and Cin != planes:
        raise ValueError("identity shortcut requires in_planes == planes")
    HW = H * W

    cin_p = _round_up(Cin, 8)          # 8-sublane aligned channel dims -> aligned tap concat
    cout_p = _round_up(planes, 8)

    bt = _pick_batch_tile(N, HW, max_lanes)
    L = bt * HW
    grid = (N // bt,)

    # channels-leading flattened layout: sample b occupies lane columns [b*HW, (b+1)*HW)
    x = jnp.transpose(x_nchw.reshape(N, Cin, HW), (1, 0, 2)).reshape(Cin, N * HW)
    x = jnp.pad(x, ((0, cin_p - Cin), (0, 0))).astype(mxu_dtype)

    def pack_w3x3(w, ci_pad):
        o = w.shape[0]
        w = jnp.transpose(w, (0, 2, 3, 1))                            # (O, kh, kw, I)
        w = jnp.pad(w, ((0, cout_p - o), (0, 0), (0, 0), (0, ci_pad - w.shape[3])))
        return w.reshape(cout_p, 9 * ci_pad).astype(mxu_dtype)        # column = k*ci + i

    def pad_vec(v):
        return jnp.pad(v.reshape(-1, 1),
                       ((0, cout_p - planes), (0, 0))).astype(jnp.float32)

    w1 = pack_w3x3(params["w1"], cin_p)
    w2 = pack_w3x3(params["w2"], cout_p)
    g1, b1 = pad_vec(params["g1"]), pad_vec(params["b1"])
    g2, b2 = pad_vec(params["g2"]), pad_vec(params["b2"])

    const = lambda n: (0, 0)
    in_specs = [
        pl.BlockSpec((cin_p, L), lambda n: (0, n)),
        pl.BlockSpec((cout_p, 9 * cin_p), const),
        pl.BlockSpec((cout_p, 1), const),
        pl.BlockSpec((cout_p, 1), const),
        pl.BlockSpec((cout_p, 9 * cout_p), const),
        pl.BlockSpec((cout_p, 1), const),
        pl.BlockSpec((cout_p, 1), const),
    ]
    args = [x, w1, g1, b1, w2, g2, b2]
    if has_shortcut:
        ws = jnp.pad(params["ws"].reshape(planes, Cin),
                     ((0, cout_p - planes), (0, cin_p - Cin))).astype(mxu_dtype)
        gs, bs = pad_vec(params["gs"]), pad_vec(params["bs"])
        in_specs += [pl.BlockSpec((cout_p, cin_p), const),
                     pl.BlockSpec((cout_p, 1), const),
                     pl.BlockSpec((cout_p, 1), const)]
        args += [ws, gs, bs]

    # VMEM budget from actual block/temp sizes (double-buffered streams + live temps),
    # clamped to a range that is safe on v5e/v6e (128 MiB) and v7x (64 MiB).
    esz = jnp.dtype(mxu_dtype).itemsize
    stream = 2 * (cin_p * L * esz + cout_p * L * 4)
    consts = 2 * ((cout_p * 9 * cin_p + cout_p * 9 * cout_p + cout_p * cin_p) * esz
                  + 6 * cout_p * 4)
    temps = (9 * max(cin_p, cout_p) * L * (4 + esz)
             + 8 * cout_p * L * 4 + 16 * L * 4)
    vmem_limit = int(min(64 * 1024 * 1024,
                         max(16 * 1024 * 1024, 2 * (stream + consts + temps))))

    out = pl.pallas_call(
        _make_block_kernel(H, W, bt, planes, cout_p, has_shortcut, mxu_dtype),
        out_shape=jax.ShapeDtypeStruct((cout_p, N * HW), out_dtype),
        grid=grid,
        in_specs=in_specs,
        out_specs=pl.BlockSpec((cout_p, L), lambda n: (0, n)),
        compiler_params=pltpu.CompilerParams(
            dimension_semantics=("parallel",),
            vmem_limit_bytes=vmem_limit),
    )(*args)

    out = out[:planes].reshape(planes, N, HW)
    return jnp.transpose(out, (1, 0, 2)).reshape(N, planes, H, W)


# ----------------------------------------------------------------------------
# Pure-JAX reference (sanity check)
# ----------------------------------------------------------------------------
def basic_block_ref(x, p):
    def conv(x, w, pad):
        return jax.lax.conv_general_dilated(
            x, w, (1, 1), ((pad, pad), (pad, pad)),
            dimension_numbers=("NCHW", "OIHW", "NCHW"),
            precision=jax.lax.Precision.HIGHEST)

    def gn(x, g, b):
        mu = jnp.mean(x, axis=(1, 2, 3), keepdims=True)
        var = jnp.mean(jnp.square(x - mu), axis=(1, 2, 3), keepdims=True)
        xn = (x - mu) / jnp.sqrt(var + _EPS)
        return xn * g[None, :, None, None] + b[None, :, None, None]

    out = jax.nn.relu(gn(conv(x, p["w1"], 1), p["g1"], p["b1"]))
    out = gn(conv(out, p["w2"], 1), p["g2"], p["b2"])
    sc = gn(conv(x, p["ws"], 0), p["gs"], p["bs"]) if "ws" in p else x
    return jax.nn.gelu(out + sc, approximate=False)


def _make_params(key, cin, planes, with_shortcut):
    ks = jax.random.split(key, 9)
    p = {
        "w1": jax.random.normal(ks[0], (planes, cin, 3, 3), jnp.float32) / (9 * cin) ** 0.5,
        "g1": 1.0 + 0.1 * jax.random.normal(ks[1], (planes,), jnp.float32),
        "b1": 0.1 * jax.random.normal(ks[2], (planes,), jnp.float32),
        "w2": jax.random.normal(ks[3], (planes, planes, 3, 3), jnp.float32) / (9 * planes) ** 0.5,
        "g2": 1.0 + 0.1 * jax.random.normal(ks[4], (planes,), jnp.float32),
        "b2": 0.1 * jax.random.normal(ks[5], (planes,), jnp.float32),
    }
    if with_shortcut:
        p["ws"] = jax.random.normal(ks[6], (planes, cin, 1, 1), jnp.float32) / cin ** 0.5
        p["gs"] = 1.0 + 0.1 * jax.random.normal(ks[7], (planes,), jnp.float32)
        p["bs"] = 0.1 * jax.random.normal(ks[8], (planes,), jnp.float32)
    return p


# ----------------------------------------------------------------------------
if __name__ == "__main__":
    key = jax.random.PRNGKey(0)
    k_x1, k_p1, k_x2, k_p2 = jax.random.split(key, 4)

    # case 1: in_planes != planes -> shortcut = Conv1x1 + GroupNorm(1)
    N, Cin, H, W = 2, 4, 16, 16
    planes = 8
    x1 = jax.random.normal(k_x1, (N, Cin, H, W), jnp.float32)
    p1 = _make_params(k_p1, Cin, planes, with_shortcut=True)
    ref1 = jax.block_until_ready(basic_block_ref(x1, p1))

    out1_bf = jax.block_until_ready(basic_block_pallas(x1, p1))                        # bf16 MXU
    out1_f32 = jax.block_until_ready(basic_block_pallas(x1, p1, mxu_dtype=jnp.float32))
    assert out1_bf.shape == (N, planes, H, W)
    err1_f = float(jnp.max(jnp.abs(out1_f32 - ref1)))
    err1_b = float(jnp.max(jnp.abs(out1_bf - ref1)))
    assert err1_f < 5e-3, f"shortcut case (f32): max abs error too large: {err1_f}"
    assert err1_b < 6e-2, f"shortcut case (bf16): max abs error too large: {err1_b}"

    # case 2: in_planes == planes -> identity shortcut
    Cin2 = planes2 = 8
    x2 = jax.random.normal(k_x2, (N, Cin2, H, W), jnp.float32)
    p2 = _make_params(k_p2, Cin2, planes2, with_shortcut=False)
    ref2 = jax.block_until_ready(basic_block_ref(x2, p2))

    out2_bf = jax.block_until_ready(basic_block_pallas(x2, p2))
    out2_f32 = jax.block_until_ready(basic_block_pallas(x2, p2, mxu_dtype=jnp.float32))
    assert out2_bf.shape == (N, planes2, H, W)
    err2_f = float(jnp.max(jnp.abs(out2_f32 - ref2)))
    err2_b = float(jnp.max(jnp.abs(out2_bf - ref2)))
    assert err2_f < 5e-3, f"identity case (f32): max abs error too large: {err2_f}"
    assert err2_b < 6e-2, f"identity case (bf16): max abs error too large: {err2_b}"

    print("KERNEL_OK")
</pallas_src>

<mosaic_0001>
module attributes {stable_mosaic.version = 11 : i64} {
  func.func @kernel(%arg0: i32, %arg1: memref<8x512xbf16, #tpu.memory_space<vmem>>, %arg2: memref<8x72xbf16, #tpu.memory_space<vmem>>, %arg3: memref<8x1xf32, #tpu.memory_space<vmem>>, %arg4: memref<8x1xf32, #tpu.memory_space<vmem>>, %arg5: memref<8x72xbf16, #tpu.memory_space<vmem>>, %arg6: memref<8x1xf32, #tpu.memory_space<vmem>>, %arg7: memref<8x1xf32, #tpu.memory_space<vmem>>, %arg8: memref<8x8xbf16, #tpu.memory_space<vmem>>, %arg9: memref<8x1xf32, #tpu.memory_space<vmem>>, %arg10: memref<8x1xf32, #tpu.memory_space<vmem>>, %arg11: memref<8x512xf32, #tpu.memory_space<vmem>>) attributes {dimension_semantics = [#tpu.dimension_semantics<parallel>], iteration_bounds = array<i64: 1>, scalar_prefetch = 0 : i64, scratch_operands = 0 : i64, tpu.core_type = #tpu.core_type<tc>, window_params = [{transform_indices = @transform_0, window_bounds = array<i64: 8, 512>}, {pipeline_mode = #tpu.pipeline_mode<synchronous>, transform_indices = @transform_1, window_bounds = array<i64: 8, 72>}, {pipeline_mode = #tpu.pipeline_mode<synchronous>, transform_indices = @transform_2, window_bounds = array<i64: 8, 1>}, {pipeline_mode = #tpu.pipeline_mode<synchronous>, transform_indices = @transform_3, window_bounds = array<i64: 8, 1>}, {pipeline_mode = #tpu.pipeline_mode<synchronous>, transform_indices = @transform_4, window_bounds = array<i64: 8, 72>}, {pipeline_mode = #tpu.pipeline_mode<synchronous>, transform_indices = @transform_5, window_bounds = array<i64: 8, 1>}, {pipeline_mode = #tpu.pipeline_mode<synchronous>, transform_indices = @transform_6, window_bounds = array<i64: 8, 1>}, {pipeline_mode = #tpu.pipeline_mode<synchronous>, transform_indices = @transform_7, window_bounds = array<i64: 8, 8>}, {pipeline_mode = #tpu.pipeline_mode<synchronous>, transform_indices = @transform_8, window_bounds = array<i64: 8, 1>}, {pipeline_mode = #tpu.pipeline_mode<synchronous>, transform_indices = @transform_9, window_bounds = array<i64: 8, 1>}, {transform_indices = @transform_10, window_bounds = array<i64: 8, 512>}]} {
    %0 = tpu.iota {dimensions = array<i32: 1>} : vector<1x512xi32>
    %1 = arith.sitofp %0 : vector<1x512xi32> to vector<1x512xf32>
    %cst = arith.constant 5.000000e-01 : f32
    %2 = vector.broadcast %cst : f32 to vector<1x512xf32>
    %3 = arith.addf %1, %2 : vector<1x512xf32>
    %cst_0 = arith.constant 6.250000e-02 : f32
    %4 = vector.broadcast %cst_0 : f32 to vector<1x512xf32>
    %5 = arith.mulf %3, %4 : vector<1x512xf32>
    %6 = math.floor %5 : vector<1x512xf32>
    %cst_1 = arith.constant 1.600000e+01 : f32
    %7 = vector.broadcast %cst_1 : f32 to vector<1x512xf32>
    %8 = arith.mulf %6, %7 : vector<1x512xf32>
    %9 = arith.subf %1, %8 : vector<1x512xf32>
    %cst_2 = arith.constant 5.000000e-01 : f32
    %10 = vector.broadcast %cst_2 : f32 to vector<1x512xf32>
    %11 = arith.addf %6, %10 : vector<1x512xf32>
    %cst_3 = arith.constant 6.250000e-02 : f32
    %12 = vector.broadcast %cst_3 : f32 to vector<1x512xf32>
    %13 = arith.mulf %11, %12 : vector<1x512xf32>
    %14 = math.floor %13 : vector<1x512xf32>
    %cst_4 = arith.constant 1.600000e+01 : f32
    %15 = vector.broadcast %cst_4 : f32 to vector<1x512xf32>
    %16 = arith.mulf %14, %15 : vector<1x512xf32>
    %17 = arith.subf %6, %16 : vector<1x512xf32>
    %cst_5 = arith.constant 5.000000e-01 : f32
    %18 = vector.broadcast %cst_5 : f32 to vector<1x512xf32>
    %19 = arith.cmpf oge, %17, %18 : vector<1x512xf32>
    %20 = arith.extui %19 : vector<1x512xi1> to vector<1x512xi32>
    %21 = arith.sitofp %20 : vector<1x512xi32> to vector<1x512xf32>
    %cst_6 = arith.constant 1.450000e+01 : f32
    %22 = vector.broadcast %cst_6 : f32 to vector<1x512xf32>
    %23 = arith.cmpf ole, %17, %22 : vector<1x512xf32>
    %24 = arith.extui %23 : vector<1x512xi1> to vector<1x512xi32>
    %25 = arith.sitofp %24 : vector<1x512xi32> to vector<1x512xf32>
    %cst_7 = arith.constant 5.000000e-01 : f32
    %26 = vector.broadcast %cst_7 : f32 to vector<1x512xf32>
    %27 = arith.cmpf oge, %9, %26 : vector<1x512xf32>
    %28 = arith.extui %27 : vector<1x512xi1> to vector<1x512xi32>
    %29 = arith.sitofp %28 : vector<1x512xi32> to vector<1x512xf32>
    %cst_8 = arith.constant 1.450000e+01 : f32
    %30 = vector.broadcast %cst_8 : f32 to vector<1x512xf32>
    %31 = arith.cmpf ole, %9, %30 : vector<1x512xf32>
    %32 = arith.extui %31 : vector<1x512xi1> to vector<1x512xi32>
    %33 = arith.sitofp %32 : vector<1x512xi32> to vector<1x512xf32>
    %34 = arith.mulf %21, %29 : vector<1x512xf32>
    %35 = arith.mulf %21, %33 : vector<1x512xf32>
    %36 = arith.mulf %25, %29 : vector<1x512xf32>
    %37 = arith.mulf %25, %33 : vector<1x512xf32>
    %cst_9 = arith.constant 5.000000e-01 : f32
    %38 = vector.broadcast %cst_9 : f32 to vector<1x512xf32>
    %39 = arith.addf %1, %38 : vector<1x512xf32>
    %cst_10 = arith.constant 3.906250e-03 : f32
    %40 = vector.broadcast %cst_10 : f32 to vector<1x512xf32>
    %41 = arith.mulf %39, %40 : vector<1x512xf32>
    %42 = math.floor %41 : vector<1x512xf32>
    %cst_11 = arith.constant 0.000000e+00 : f32
    %43 = vector.broadcast %cst_11 : f32 to vector<1x512xf32>
    %44 = arith.cmpf oeq, %42, %43 : vector<1x512xf32>
    %45 = arith.extui %44 : vector<1x512xi1> to vector<1x512xi32>
    %46 = arith.sitofp %45 : vector<1x512xi32> to vector<1x512xf32>
    %cst_12 = arith.constant 1.000000e+00 : f32
    %47 = vector.broadcast %cst_12 : f32 to vector<1x512xf32>
    %48 = arith.cmpf oeq, %42, %47 : vector<1x512xf32>
    %49 = arith.extui %48 : vector<1x512xi1> to vector<1x512xi32>
    %50 = arith.sitofp %49 : vector<1x512xi32> to vector<1x512xf32>
    %c0 = arith.constant 0 : index
    %c0_13 = arith.constant 0 : index
    %51 = vector.load %arg1[%c0, %c0_13] : memref<8x512xbf16, #tpu.memory_space<vmem>>, vector<8x512xbf16>
    %52 = arith.extf %51 : vector<8x512xbf16> to vector<8x512xf32>
    %c17_i32 = arith.constant 17 : i32
    %53 = tpu.dynamic_rotate %52 by %c17_i32 dim 1 : vector<8x512xf32>, i32 -> vector<8x512xf32>
    %54 = vector.broadcast %34 : vector<1x512xf32> to vector<8x512xf32>
    %55 = arith.mulf %53, %54 : vector<8x512xf32>
    %c16_i32 = arith.constant 16 : i32
    %56 = tpu.dynamic_rotate %52 by %c16_i32 dim 1 : vector<8x512xf32>, i32 -> vector<8x512xf32>
    %57 = vector.broadcast %21 : vector<1x512xf32> to vector<8x512xf32>
    %58 = arith.mulf %56, %57 : vector<8x512xf32>
    %c15_i32 = arith.constant 15 : i32
    %59 = tpu.dynamic_rotate %52 by %c15_i32 dim 1 : vector<8x512xf32>, i32 -> vector<8x512xf32>
    %60 = vector.broadcast %35 : vector<1x512xf32> to vector<8x512xf32>
    %61 = arith.mulf %59, %60 : vector<8x512xf32>
    %c1_i32 = arith.constant 1 : i32
    %62 = tpu.dynamic_rotate %52 by %c1_i32 dim 1 : vector<8x512xf32>, i32 -> vector<8x512xf32>
    %63 = vector.broadcast %29 : vector<1x512xf32> to vector<8x512xf32>
    %64 = arith.mulf %62, %63 : vector<8x512xf32>
    %c511_i32 = arith.constant 511 : i32
    %65 = tpu.dynamic_rotate %52 by %c511_i32 dim 1 : vector<8x512xf32>, i32 -> vector<8x512xf32>
    %66 = vector.broadcast %33 : vector<1x512xf32> to vector<8x512xf32>
    %67 = arith.mulf %65, %66 : vector<8x512xf32>
    %c497_i32 = arith.constant 497 : i32
    %68 = tpu.dynamic_rotate %52 by %c497_i32 dim 1 : vector<8x512xf32>, i32 -> vector<8x512xf32>
    %69 = vector.broadcast %36 : vector<1x512xf32> to vector<8x512xf32>
    %70 = arith.mulf %68, %69 : vector<8x512xf32>
    %c496_i32 = arith.constant 496 : i32
    %71 = tpu.dynamic_rotate %52 by %c496_i32 dim 1 : vector<8x512xf32>, i32 -> vector<8x512xf32>
    %72 = vector.broadcast %25 : vector<1x512xf32> to vector<8x512xf32>
    %73 = arith.mulf %71, %72 : vector<8x512xf32>
    %c495_i32 = arith.constant 495 : i32
    %74 = tpu.dynamic_rotate %52 by %c495_i32 dim 1 : vector<8x512xf32>, i32 -> vector<8x512xf32>
    %75 = vector.broadcast %37 : vector<1x512xf32> to vector<8x512xf32>
    %76 = arith.mulf %74, %75 : vector<8x512xf32>
    %77 = tpu.concatenate %55, %58, %61, %64, %52, %67, %70, %73, %76 in 0 : vector<8x512xf32>, vector<8x512xf32>, vector<8x512xf32>, vector<8x512xf32>, vector<8x512xf32>, vector<8x512xf32>, vector<8x512xf32>, vector<8x512xf32>, vector<8x512xf32> -> vector<72x512xf32>
    %78 = arith.truncf %77 : vector<72x512xf32> to vector<72x512xbf16>
    %c0_14 = arith.constant 0 : index
    %c0_15 = arith.constant 0 : index
    %79 = vector.load %arg2[%c0_14, %c0_15] : memref<8x72xbf16, #tpu.memory_space<vmem>>, vector<8x72xbf16>
    %cst_16 = arith.constant dense<0.000000e+00> : vector<8x512xf32>
    %80 = tpu.matmul %79, %78, %cst_16 {dimension_numbers = #tpu.dot_dimension_numbers<[1], [0], [0], [1], [0, 0, 1, 1], [], []>} : vector<8x72xbf16>, vector<72x512xbf16>, vector<8x512xf32> -> vector<8x512xf32>
    %c0_17 = arith.constant 0 : index
    %c0_18 = arith.constant 0 : index
    %81 = vector.load %arg3[%c0_17, %c0_18] : memref<8x1xf32, #tpu.memory_space<vmem>>, vector<8x1xf32>
    %c0_19 = arith.constant 0 : index
    %c0_20 = arith.constant 0 : index
    %82 = vector.load %arg4[%c0_19, %c0_20] : memref<8x1xf32, #tpu.memory_space<vmem>>, vector<8x1xf32>
    %cst_21 = arith.constant dense<0.000000e+00> : vector<512xf32>
    %83 = vector.multi_reduction <add>, %80, %cst_21 [0] : vector<8x512xf32> to vector<512xf32>
    %84 = vector.shape_cast %83 : vector<512xf32> to vector<1x512xf32>
    %cst_22 = arith.constant 0.000000e+00 : f32
    %85 = vector.broadcast %cst_22 : f32 to vector<1x512xf32>
    %86 = arith.mulf %84, %46 : vector<1x512xf32>
    %cst_23 = arith.constant dense<0.000000e+00> : vector<1xf32>
    %87 = vector.multi_reduction <add>, %86, %cst_23 [1] : vector<1x512xf32> to vector<1xf32>
    %88 = vector.shape_cast %87 : vector<1xf32> to vector<1x1xf32>
    %cst_24 = arith.constant 2.048000e+03 : f32
    %89 = vector.broadcast %cst_24 : f32 to vector<1x1xf32>
    %90 = arith.divf %88, %89 : vector<1x1xf32>
    %91 = vector.broadcast %90 : vector<1x1xf32> to vector<1x512xf32>
    %92 = arith.mulf %91, %46 : vector<1x512xf32>
    %93 = arith.addf %85, %92 : vector<1x512xf32>
    %94 = arith.mulf %84, %50 : vector<1x512xf32>
    %cst_25 = arith.constant dense<0.000000e+00> : vector<1xf32>
    %95 = vector.multi_reduction <add>, %94, %cst_25 [1] : vector<1x512xf32> to vector<1xf32>
    %96 = vector.shape_cast %95 : vector<1xf32> to vector<1x1xf32>
    %cst_26 = arith.constant 2.048000e+03 : f32
    %97 = vector.broadcast %cst_26 : f32 to vector<1x1xf32>
    %98 = arith.divf %96, %97 : vector<1x1xf32>
    %99 = vector.broadcast %98 : vector<1x1xf32> to vector<1x512xf32>
    %100 = arith.mulf %99, %50 : vector<1x512xf32>
    %101 = arith.addf %93, %100 : vector<1x512xf32>
    %102 = vector.broadcast %101 : vector<1x512xf32> to vector<8x512xf32>
    %103 = arith.subf %80, %102 : vector<8x512xf32>
    %104 = arith.mulf %103, %103 : vector<8x512xf32>
    %cst_27 = arith.constant dense<0.000000e+00> : vector<512xf32>
    %105 = vector.multi_reduction <add>, %104, %cst_27 [0] : vector<8x512xf32> to vector<512xf32>
    %106 = vector.shape_cast %105 : vector<512xf32> to vector<1x512xf32>
    %cst_28 = arith.constant 0.000000e+00 : f32
    %107 = vector.broadcast %cst_28 : f32 to vector<1x512xf32>
    %108 = arith.mulf %106, %46 : vector<1x512xf32>
    %cst_29 = arith.constant dense<0.000000e+00> : vector<1xf32>
    %109 = vector.multi_reduction <add>, %108, %cst_29 [1] : vector<1x512xf32> to vector<1xf32>
    %110 = vector.shape_cast %109 : vector<1xf32> to vector<1x1xf32>
    %cst_30 = arith.constant 2.048000e+03 : f32
    %111 = vector.broadcast %cst_30 : f32 to vector<1x1xf32>
    %112 = arith.divf %110, %111 : vector<1x1xf32>
    %cst_31 = arith.constant 9.99999974E-6 : f32
    %113 = vector.broadcast %cst_31 : f32 to vector<1x1xf32>
    %114 = arith.addf %112, %113 : vector<1x1xf32>
    %115 = math.rsqrt %114 : vector<1x1xf32>
    %116 = vector.broadcast %115 : vector<1x1xf32> to vector<1x512xf32>
    %117 = arith.mulf %116, %46 : vector<1x512xf32>
    %118 = arith.addf %107, %117 : vector<1x512xf32>
    %119 = arith.mulf %106, %50 : vector<1x512xf32>
    %cst_32 = arith.constant dense<0.000000e+00> : vector<1xf32>
    %120 = vector.multi_reduction <add>, %119, %cst_32 [1] : vector<1x512xf32> to vector<1xf32>
    %121 = vector.shape_cast %120 : vector<1xf32> to vector<1x1xf32>
    %cst_33 = arith.constant 2.048000e+03 : f32
    %122 = vector.broadcast %cst_33 : f32 to vector<1x1xf32>
    %123 = arith.divf %121, %122 : vector<1x1xf32>
    %cst_34 = arith.constant 9.99999974E-6 : f32
    %124 = vector.broadcast %cst_34 : f32 to vector<1x1xf32>
    %125 = arith.addf %123, %124 : vector<1x1xf32>
    %126 = math.rsqrt %125 : vector<1x1xf32>
    %127 = vector.broadcast %126 : vector<1x1xf32> to vector<1x512xf32>
    %128 = arith.mulf %127, %50 : vector<1x512xf32>
    %129 = arith.addf %118, %128 : vector<1x512xf32>
    %130 = vector.broadcast %129 : vector<1x512xf32> to vector<8x512xf32>
    %131 = vector.broadcast %81 : vector<8x1xf32> to vector<8x512xf32>
    %132 = arith.mulf %130, %131 : vector<8x512xf32>
    %133 = arith.mulf %103, %132 : vector<8x512xf32>
    %134 = vector.broadcast %82 : vector<8x1xf32> to vector<8x512xf32>
    %135 = arith.addf %133, %134 : vector<8x512xf32>
    %cst_35 = arith.constant 0.000000e+00 : f32
    %136 = vector.broadcast %cst_35 : f32 to vector<8x512xf32>
    %137 = arith.maximumf %135, %136 : vector<8x512xf32>
    %c17_i32_36 = arith.constant 17 : i32
    %138 = tpu.dynamic_rotate %137 by %c17_i32_36 dim 1 : vector<8x512xf32>, i32 -> vector<8x512xf32>
    %139 = vector.broadcast %34 : vector<1x512xf32> to vector<8x512xf32>
    %140 = arith.mulf %138, %139 : vector<8x512xf32>
    %c16_i32_37 = arith.constant 16 : i32
    %141 = tpu.dynamic_rotate %137 by %c16_i32_37 dim 1 : vector<8x512xf32>, i32 -> vector<8x512xf32>
    %142 = vector.broadcast %21 : vector<1x512xf32> to vector<8x512xf32>
    %143 = arith.mulf %141, %142 : vector<8x512xf32>
    %c15_i32_38 = arith.constant 15 : i32
    %144 = tpu.dynamic_rotate %137 by %c15_i32_38 dim 1 : vector<8x512xf32>, i32 -> vector<8x512xf32>
    %145 = vector.broadcast %35 : vector<1x512xf32> to vector<8x512xf32>
    %146 = arith.mulf %144, %145 : vector<8x512xf32>
    %c1_i32_39 = arith.constant 1 : i32
    %147 = tpu.dynamic_rotate %137 by %c1_i32_39 dim 1 : vector<8x512xf32>, i32 -> vector<8x512xf32>
    %148 = vector.broadcast %29 : vector<1x512xf32> to vector<8x512xf32>
    %149 = arith.mulf %147, %148 : vector<8x512xf32>
    %c511_i32_40 = arith.constant 511 : i32
    %150 = tpu.dynamic_rotate %137 by %c511_i32_40 dim 1 : vector<8x512xf32>, i32 -> vector<8x512xf32>
    %151 = vector.broadcast %33 : vector<1x512xf32> to vector<8x512xf32>
    %152 = arith.mulf %150, %151 : vector<8x512xf32>
    %c497_i32_41 = arith.constant 497 : i32
    %153 = tpu.dynamic_rotate %137 by %c497_i32_41 dim 1 : vector<8x512xf32>, i32 -> vector<8x512xf32>
    %154 = vector.broadcast %36 : vector<1x512xf32> to vector<8x512xf32>
    %155 = arith.mulf %153, %154 : vector<8x512xf32>
    %c496_i32_42 = arith.constant 496 : i32
    %156 = tpu.dynamic_rotate %137 by %c496_i32_42 dim 1 : vector<8x512xf32>, i32 -> vector<8x512xf32>
    %157 = vector.broadcast %25 : vector<1x512xf32> to vector<8x512xf32>
    %158 = arith.mulf %156, %157 : vector<8x512xf32>
    %c495_i32_43 = arith.constant 495 : i32
    %159 = tpu.dynamic_rotate %137 by %c495_i32_43 dim 1 : vector<8x512xf32>, i32 -> vector<8x512xf32>
    %160 = vector.broadcast %37 : vector<1x512xf32> to vector<8x512xf32>
    %161 = arith.mulf %159, %160 : vector<8x512xf32>
    %162 = tpu.concatenate %140, %143, %146, %149, %137, %152, %155, %158, %161 in 0 : vector<8x512xf32>, vector<8x512xf32>, vector<8x512xf32>, vector<8x512xf32>, vector<8x512xf32>, vector<8x512xf32>, vector<8x512xf32>, vector<8x512xf32>, vector<8x512xf32> -> vector<72x512xf32>
    %163 = arith.truncf %162 : vector<72x512xf32> to vector<72x512xbf16>
    %c0_44 = arith.constant 0 : index
    %c0_45 = arith.constant 0 : index
    %164 = vector.load %arg5[%c0_44, %c0_45] : memref<8x72xbf16, #tpu.memory_space<vmem>>, vector<8x72xbf16>
    %cst_46 = arith.constant dense<0.000000e+00> : vector<8x512xf32>
    %165 = tpu.matmul %164, %163, %cst_46 {dimension_numbers = #tpu.dot_dimension_numbers<[1], [0], [0], [1], [0, 0, 1, 1], [], []>} : vector<8x72xbf16>, vector<72x512xbf16>, vector<8x512xf32> -> vector<8x512xf32>
    %c0_47 = arith.constant 0 : index
    %c0_48 = arith.constant 0 : index
    %166 = vector.load %arg6[%c0_47, %c0_48] : memref<8x1xf32, #tpu.memory_space<vmem>>, vector<8x1xf32>
    %c0_49 = arith.constant 0 : index
    %c0_50 = arith.constant 0 : index
    %167 = vector.load %arg7[%c0_49, %c0_50] : memref<8x1xf32, #tpu.memory_space<vmem>>, vector<8x1xf32>
    %cst_51 = arith.constant dense<0.000000e+00> : vector<512xf32>
    %168 = vector.multi_reduction <add>, %165, %cst_51 [0] : vector<8x512xf32> to vector<512xf32>
    %169 = vector.shape_cast %168 : vector<512xf32> to vector<1x512xf32>
    %cst_52 = arith.constant 0.000000e+00 : f32
    %170 = vector.broadcast %cst_52 : f32 to vector<1x512xf32>
    %171 = arith.mulf %169, %46 : vector<1x512xf32>
    %cst_53 = arith.constant dense<0.000000e+00> : vector<1xf32>
    %172 = vector.multi_reduction <add>, %171, %cst_53 [1] : vector<1x512xf32> to vector<1xf32>
    %173 = vector.shape_cast %172 : vector<1xf32> to vector<1x1xf32>
    %cst_54 = arith.constant 2.048000e+03 : f32
    %174 = vector.broadcast %cst_54 : f32 to vector<1x1xf32>
    %175 = arith.divf %173, %174 : vector<1x1xf32>
    %176 = vector.broadcast %175 : vector<1x1xf32> to vector<1x512xf32>
    %177 = arith.mulf %176, %46 : vector<1x512xf32>
    %178 = arith.addf %170, %177 : vector<1x512xf32>
    %179 = arith.mulf %169, %50 : vector<1x512xf32>
    %cst_55 = arith.constant dense<0.000000e+00> : vector<1xf32>
    %180 = vector.multi_reduction <add>, %179, %cst_55 [1] : vector<1x512xf32> to vector<1xf32>
    %181 = vector.shape_cast %180 : vector<1xf32> to vector<1x1xf32>
    %cst_56 = arith.constant 2.048000e+03 : f32
    %182 = vector.broadcast %cst_56 : f32 to vector<1x1xf32>
    %183 = arith.divf %181, %182 : vector<1x1xf32>
    %184 = vector.broadcast %183 : vector<1x1xf32> to vector<1x512xf32>
    %185 = arith.mulf %184, %50 : vector<1x512xf32>
    %186 = arith.addf %178, %185 : vector<1x512xf32>
    %187 = vector.broadcast %186 : vector<1x512xf32> to vector<8x512xf32>
    %188 = arith.subf %165, %187 : vector<8x512xf32>
    %189 = arith.mulf %188, %188 : vector<8x512xf32>
    %cst_57 = arith.constant dense<0.000000e+00> : vector<512xf32>
    %190 = vector.multi_reduction <add>, %189, %cst_57 [0] : vector<8x512xf32> to vector<512xf32>
    %191 = vector.shape_cast %190 : vector<512xf32> to vector<1x512xf32>
    %cst_58 = arith.constant 0.000000e+00 : f32
    %192 = vector.broadcast %cst_58 : f32 to vector<1x512xf32>
    %193 = arith.mulf %191, %46 : vector<1x512xf32>
    %cst_59 = arith.constant dense<0.000000e+00> : vector<1xf32>
    %194 = vector.multi_reduction <add>, %193, %cst_59 [1] : vector<1x512xf32> to vector<1xf32>
    %195 = vector.shape_cast %194 : vector<1xf32> to vector<1x1xf32>
    %cst_60 = arith.constant 2.048000e+03 : f32
    %196 = vector.broadcast %cst_60 : f32 to vector<1x1xf32>
    %197 = arith.divf %195, %196 : vector<1x1xf32>
    %cst_61 = arith.constant 9.99999974E-6 : f32
    %198 = vector.broadcast %cst_61 : f32 to vector<1x1xf32>
    %199 = arith.addf %197, %198 : vector<1x1xf32>
    %200 = math.rsqrt %199 : vector<1x1xf32>
    %201 = vector.broadcast %200 : vector<1x1xf32> to vector<1x512xf32>
    %202 = arith.mulf %201, %46 : vector<1x512xf32>
    %203 = arith.addf %192, %202 : vector<1x512xf32>
    %204 = arith.mulf %191, %50 : vector<1x512xf32>
    %cst_62 = arith.constant dense<0.000000e+00> : vector<1xf32>
    %205 = vector.multi_reduction <add>, %204, %cst_62 [1] : vector<1x512xf32> to vector<1xf32>
    %206 = vector.shape_cast %205 : vector<1xf32> to vector<1x1xf32>
    %cst_63 = arith.constant 2.048000e+03 : f32
    %207 = vector.broadcast %cst_63 : f32 to vector<1x1xf32>
    %208 = arith.divf %206, %207 : vector<1x1xf32>
    %cst_64 = arith.constant 9.99999974E-6 : f32
    %209 = vector.broadcast %cst_64 : f32 to vector<1x1xf32>
    %210 = arith.addf %208, %209 : vector<1x1xf32>
    %211 = math.rsqrt %210 : vector<1x1xf32>
    %212 = vector.broadcast %211 : vector<1x1xf32> to vector<1x512xf32>
    %213 = arith.mulf %212, %50 : vector<1x512xf32>
    %214 = arith.addf %203, %213 : vector<1x512xf32>
    %215 = vector.broadcast %214 : vector<1x512xf32> to vector<8x512xf32>
    %216 = vector.broadcast %166 : vector<8x1xf32> to vector<8x512xf32>
    %217 = arith.mulf %215, %216 : vector<8x512xf32>
    %218 = arith.mulf %188, %217 : vector<8x512xf32>
    %219 = vector.broadcast %167 : vector<8x1xf32> to vector<8x512xf32>
    %220 = arith.addf %218, %219 : vector<8x512xf32>
    %c0_65 = arith.constant 0 : index
    %c0_66 = arith.constant 0 : index
    %221 = vector.load %arg8[%c0_65, %c0_66] : memref<8x8xbf16, #tpu.memory_space<vmem>>, vector<8x8xbf16>
    %cst_67 = arith.constant dense<0.000000e+00> : vector<8x512xf32>
    %222 = tpu.matmul %221, %51, %cst_67 {dimension_numbers = #tpu.dot_dimension_numbers<[1], [0], [0], [1], [0, 0, 1, 1], [], []>} : vector<8x8xbf16>, vector<8x512xbf16>, vector<8x512xf32> -> vector<8x512xf32>
    %c0_68 = arith.constant 0 : index
    %c0_69 = arith.constant 0 : index
    %223 = vector.load %arg9[%c0_68, %c0_69] : memref<8x1xf32, #tpu.memory_space<vmem>>, vector<8x1xf32>
    %c0_70 = arith.constant 0 : index
    %c0_71 = arith.constant 0 : index
    %224 = vector.load %arg10[%c0_70, %c0_71] : memref<8x1xf32, #tpu.memory_space<vmem>>, vector<8x1xf32>
    %cst_72 = arith.constant dense<0.000000e+00> : vector<512xf32>
    %225 = vector.multi_reduction <add>, %222, %cst_72 [0] : vector<8x512xf32> to vector<512xf32>
    %226 = vector.shape_cast %225 : vector<512xf32> to vector<1x512xf32>
    %cst_73 = arith.constant 0.000000e+00 : f32
    %227 = vector.broadcast %cst_73 : f32 to vector<1x512xf32>
    %228 = arith.mulf %226, %46 : vector<1x512xf32>
    %cst_74 = arith.constant dense<0.000000e+00> : vector<1xf32>
    %229 = vector.multi_reduction <add>, %228, %cst_74 [1] : vector<1x512xf32> to vector<1xf32>
    %230 = vector.shape_cast %229 : vector<1xf32> to vector<1x1xf32>
    %cst_75 = arith.constant 2.048000e+03 : f32
    %231 = vector.broadcast %cst_75 : f32 to vector<1x1xf32>
    %232 = arith.divf %230, %231 : vector<1x1xf32>
    %233 = vector.broadcast %232 : vector<1x1xf32> to vector<1x512xf32>
    %234 = arith.mulf %233, %46 : vector<1x512xf32>
    %235 = arith.addf %227, %234 : vector<1x512xf32>
    %236 = arith.mulf %226, %50 : vector<1x512xf32>
    %cst_76 = arith.constant dense<0.000000e+00> : vector<1xf32>
    %237 = vector.multi_reduction <add>, %236, %cst_76 [1] : vector<1x512xf32> to vector<1xf32>
    %238 = vector.shape_cast %237 : vector<1xf32> to vector<1x1xf32>
    %cst_77 = arith.constant 2.048000e+03 : f32
    %239 = vector.broadcast %cst_77 : f32 to vector<1x1xf32>
    %240 = arith.divf %238, %239 : vector<1x1xf32>
    %241 = vector.broadcast %240 : vector<1x1xf32> to vector<1x512xf32>
    %242 = arith.mulf %241, %50 : vector<1x512xf32>
    %243 = arith.addf %235, %242 : vector<1x512xf32>
    %244 = vector.broadcast %243 : vector<1x512xf32> to vector<8x512xf32>
    %245 = arith.subf %222, %244 : vector<8x512xf32>
    %246 = arith.mulf %245, %245 : vector<8x512xf32>
    %cst_78 = arith.constant dense<0.000000e+00> : vector<512xf32>
    %247 = vector.multi_reduction <add>, %246, %cst_78 [0] : vector<8x512xf32> to vector<512xf32>
    %248 = vector.shape_cast %247 : vector<512xf32> to vector<1x512xf32>
    %cst_79 = arith.constant 0.000000e+00 : f32
    %249 = vector.broadcast %cst_79 : f32 to vector<1x512xf32>
    %250 = arith.mulf %248, %46 : vector<1x512xf32>
    %cst_80 = arith.constant dense<0.000000e+00> : vector<1xf32>
    %251 = vector.multi_reduction <add>, %250, %cst_80 [1] : vector<1x512xf32> to vector<1xf32>
    %252 = vector.shape_cast %251 : vector<1xf32> to vector<1x1xf32>
    %cst_81 = arith.constant 2.048000e+03 : f32
    %253 = vector.broadcast %cst_81 : f32 to vector<1x1xf32>
    %254 = arith.divf %252, %253 : vector<1x1xf32>
    %cst_82 = arith.constant 9.99999974E-6 : f32
    %255 = vector.broadcast %cst_82 : f32 to vector<1x1xf32>
    %256 = arith.addf %254, %255 : vector<1x1xf32>
    %257 = math.rsqrt %256 : vector<1x1xf32>
    %258 = vector.broadcast %257 : vector<1x1xf32> to vector<1x512xf32>
    %259 = arith.mulf %258, %46 : vector<1x512xf32>
    %260 = arith.addf %249, %259 : vector<1x512xf32>
    %261 = arith.mulf %248, %50 : vector<1x512xf32>
    %cst_83 = arith.constant dense<0.000000e+00> : vector<1xf32>
    %262 = vector.multi_reduction <add>, %261, %cst_83 [1] : vector<1x512xf32> to vector<1xf32>
    %263 = vector.shape_cast %262 : vector<1xf32> to vector<1x1xf32>
    %cst_84 = arith.constant 2.048000e+03 : f32
    %264 = vector.broadcast %cst_84 : f32 to vector<1x1xf32>
    %265 = arith.divf %263, %264 : vector<1x1xf32>
    %cst_85 = arith.constant 9.99999974E-6 : f32
    %266 = vector.broadcast %cst_85 : f32 to vector<1x1xf32>
    %267 = arith.addf %265, %266 : vector<1x1xf32>
    %268 = math.rsqrt %267 : vector<1x1xf32>
    %269 = vector.broadcast %268 : vector<1x1xf32> to vector<1x512xf32>
    %270 = arith.mulf %269, %50 : vector<1x512xf32>
    %271 = arith.addf %260, %270 : vector<1x512xf32>
    %272 = vector.broadcast %271 : vector<1x512xf32> to vector<8x512xf32>
    %273 = vector.broadcast %223 : vector<8x1xf32> to vector<8x512xf32>
    %274 = arith.mulf %272, %273 : vector<8x512xf32>
    %275 = arith.mulf %245, %274 : vector<8x512xf32>
    %276 = vector.broadcast %224 : vector<8x1xf32> to vector<8x512xf32>
    %277 = arith.addf %275, %276 : vector<8x512xf32>
    %278 = arith.addf %220, %277 : vector<8x512xf32>
    %cst_86 = arith.constant 5.000000e-01 : f32
    %279 = vector.broadcast %cst_86 : f32 to vector<8x512xf32>
    %280 = arith.mulf %279, %278 : vector<8x512xf32>
    %cst_87 = arith.constant 0.707106769 : f32
    %281 = vector.broadcast %cst_87 : f32 to vector<8x512xf32>
    %282 = arith.mulf %278, %281 : vector<8x512xf32>
    %283 = math.absf %282 : vector<8x512xf32>
    %cst_88 = arith.constant 0.327591091 : f32
    %284 = vector.broadcast %cst_88 : f32 to vector<8x512xf32>
    %285 = arith.mulf %284, %283 : vector<8x512xf32>
    %cst_89 = arith.constant 1.000000e+00 : f32
    %286 = vector.broadcast %cst_89 : f32 to vector<8x512xf32>
    %287 = arith.addf %286, %285 : vector<8x512xf32>
    %cst_90 = arith.constant 1.000000e+00 : f32
    %288 = vector.broadcast %cst_90 : f32 to vector<8x512xf32>
    %289 = arith.divf %288, %287 : vector<8x512xf32>
    %cst_91 = arith.constant 1.06140542 : f32
    %290 = vector.broadcast %cst_91 : f32 to vector<8x512xf32>
    %291 = arith.mulf %290, %289 : vector<8x512xf32>
    %cst_92 = arith.constant -1.45315206 : f32
    %292 = vector.broadcast %cst_92 : f32 to vector<8x512xf32>
    %293 = arith.addf %291, %292 : vector<8x512xf32>
    %294 = arith.mulf %293, %289 : vector<8x512xf32>
    %cst_93 = arith.constant 1.42141378 : f32
    %295 = vector.broadcast %cst_93 : f32 to vector<8x512xf32>
    %296 = arith.addf %294, %295 : vector<8x512xf32>
    %297 = arith.mulf %296, %289 : vector<8x512xf32>
    %cst_94 = arith.constant -0.284496725 : f32
    %298 = vector.broadcast %cst_94 : f32 to vector<8x512xf32>
    %299 = arith.addf %297, %298 : vector<8x512xf32>
    %300 = arith.mulf %299, %289 : vector<8x512xf32>
    %cst_95 = arith.constant 0.254829586 : f32
    %301 = vector.broadcast %cst_95 : f32 to vector<8x512xf32>
    %302 = arith.addf %300, %301 : vector<8x512xf32>
    %303 = arith.mulf %302, %289 : vector<8x512xf32>
    %cst_96 = arith.constant 0.000000e+00 : f32
    %304 = vector.broadcast %cst_96 : f32 to vector<8x512xf32>
    %305 = arith.subf %304, %283 : vector<8x512xf32>
    %306 = arith.mulf %305, %283 : vector<8x512xf32>
    %307 = math.exp %306 : vector<8x512xf32>
    %308 = arith.mulf %303, %307 : vector<8x512xf32>
    %cst_97 = arith.constant 1.000000e+00 : f32
    %309 = vector.broadcast %cst_97 : f32 to vector<8x512xf32>
    %310 = arith.subf %309, %308 : vector<8x512xf32>
    %cst_98 = arith.constant 0.000000e+00 : f32
    %311 = vector.broadcast %cst_98 : f32 to vector<8x512xf32>
    %312 = arith.cmpf oge, %282, %311 : vector<8x512xf32>
    %cst_99 = arith.constant 0.000000e+00 : f32
    %313 = vector.broadcast %cst_99 : f32 to vector<8x512xf32>
    %314 = arith.subf %313, %310 : vector<8x512xf32>
    %315 = arith.select %312, %310, %314 : vector<8x512xi1>, vector<8x512xf32>
    %cst_100 = arith.constant 1.000000e+00 : f32
    %316 = vector.broadcast %cst_100 : f32 to vector<8x512xf32>
    %317 = arith.addf %316, %315 : vector<8x512xf32>
    %318 = arith.mulf %280, %317 : vector<8x512xf32>
    %c0_101 = arith.constant 0 : index
    %c0_102 = arith.constant 0 : index
    %319 = vector.load %arg11[%c0_101, %c0_102] : memref<8x512xf32, #tpu.memory_space<vmem>>, vector<8x512xf32>
    tpu.vector_store %arg11[%c0_101, %c0_102], %318 {strides = array<i32>} : memref<8x512xf32, #tpu.memory_space<vmem>>, vector<8x512xf32>,
    return
  }
  func.func @transform_0(%arg0: i32) -> (i32, i32) {
    %c0_i32 = arith.constant 0 : i32
    %c0_i32_0 = arith.constant 0 : i32
    return %c0_i32, %arg0 : i32, i32
  }
  func.func @transform_1(%arg0: i32) -> (i32, i32) {
    %c0_i32 = arith.constant 0 : i32
    %c0_i32_0 = arith.constant 0 : i32
    %c0_i32_1 = arith.constant 0 : i32
    return %c0_i32, %c0_i32_0 : i32, i32
  }
  func.func @transform_2(%arg0: i32) -> (i32, i32) {
    %c0_i32 = arith.constant 0 : i32
    %c0_i32_0 = arith.constant 0 : i32
    %c0_i32_1 = arith.constant 0 : i32
    return %c0_i32, %c0_i32_0 : i32, i32
  }
  func.func @transform_3(%arg0: i32) -> (i32, i32) {
    %c0_i32 = arith.constant 0 : i32
    %c0_i32_0 = arith.constant 0 : i32
    %c0_i32_1 = arith.constant 0 : i32
    return %c0_i32, %c0_i32_0 : i32, i32
  }
  func.func @transform_4(%arg0: i32) -> (i32, i32) {
    %c0_i32 = arith.constant 0 : i32
    %c0_i32_0 = arith.constant 0 : i32
    %c0_i32_1 = arith.constant 0 : i32
    return %c0_i32, %c0_i32_0 : i32, i32
  }
  func.func @transform_5(%arg0: i32) -> (i32, i32) {
    %c0_i32 = arith.constant 0 : i32
    %c0_i32_0 = arith.constant 0 : i32
    %c0_i32_1 = arith.constant 0 : i32
    return %c0_i32, %c0_i32_0 : i32, i32
  }
  func.func @transform_6(%arg0: i32) -> (i32, i32) {
    %c0_i32 = arith.constant 0 : i32
    %c0_i32_0 = arith.constant 0 : i32
    %c0_i32_1 = arith.constant 0 : i32
    return %c0_i32, %c0_i32_0 : i32, i32
  }
  func.func @transform_7(%arg0: i32) -> (i32, i32) {
    %c0_i32 = arith.constant 0 : i32
    %c0_i32_0 = arith.constant 0 : i32
    %c0_i32_1 = arith.constant 0 : i32
    return %c0_i32, %c0_i32_0 : i32, i32
  }
  func.func @transform_8(%arg0: i32) -> (i32, i32) {
    %c0_i32 = arith.constant 0 : i32
    %c0_i32_0 = arith.constant 0 : i32
    %c0_i32_1 = arith.constant 0 : i32
    return %c0_i32, %c0_i32_0 : i32, i32
  }
  func.func @transform_9(%arg0: i32) -> (i32, i32) {
    %c0_i32 = arith.constant 0 : i32
    %c0_i32_0 = arith.constant 0 : i32
    %c0_i32_1 = arith.constant 0 : i32
    return %c0_i32, %c0_i32_0 : i32, i32
  }
  func.func @transform_10(%arg0: i32) -> (i32, i32) {
    %c0_i32 = arith.constant 0 : i32
    %c0_i32_0 = arith.constant 0 : i32
    return %c0_i32, %arg0 : i32, i32
  }
}

</mosaic_0001>

<llo_original>
// kernel: tpu_custom_call.1
$region0: #{tpu_custom_call.1}
  #allocation0 [shape = 'u32[]', space=smem, size = 0x4, offset = 0x4, fixed_abs, tag = 'smem constant byte address 0x4 - core index']
  #allocation1 [shape = 'u32[144,128]{1,0:T(1,128)}', space=vmem, size = 0x12000, scoped, tag = 'internal scratch']
  %s0 = inlined_call_operand.vmem [shape: bf16[8,512], index: 0, kind: input, shape index: {}]
  %s1 = inlined_call_operand.vmem [shape: bf16[8,72], index: 1, kind: input, shape index: {}]
  %s2 = inlined_call_operand.vmem [shape: f32[8,1], index: 2, kind: input, shape index: {}]
  %s3 = inlined_call_operand.vmem [shape: f32[8,1], index: 3, kind: input, shape index: {}]
  %s4 = inlined_call_operand.vmem [shape: bf16[8,72], index: 4, kind: input, shape index: {}]
  %s5 = inlined_call_operand.vmem [shape: f32[8,1], index: 5, kind: input, shape index: {}]
  %s6 = inlined_call_operand.vmem [shape: f32[8,1], index: 6, kind: input, shape index: {}]
  %s7 = inlined_call_operand.vmem [shape: bf16[8,8], index: 7, kind: input, shape index: {}]
  %s8 = inlined_call_operand.vmem [shape: f32[8,1], index: 8, kind: input, shape index: {}]
  %s9 = inlined_call_operand.vmem [shape: f32[8,1], index: 9, kind: input, shape index: {}]
  %s10 = inlined_call_operand.hbm [shape: f32[8,512], index: 10, kind: output, shape index: {}]
  %s11 = sld [smem:[#allocation0]]
  $region50: #{tpu_custom_call.1} parent=0
    _
  %s13 = ssub.s32 1, %s11
  %s14 = scalar_select 0, %s13, %s11
  $region1: #{tpu_custom_call.1} parent=0
    #allocation2 [shape = 'u8[16384]{0}', space=vmem, size = 0x4000, scoped, tag = 'output window, operand 0, single buffered']
    #allocation3 [shape = 's32[1]{0}', space=sflag, size = 0x4, scoped, tag = 'scoped memory for tpu_custom_call.1']
    %15 = vsyncpa [#allocation3], 0
    // Predicated region
    $region2: #{tpu_custom_call.1} parent=1 // pred_check
      _
    $region3: #{tpu_custom_call.1} parent=1 // pred_check_branch
      %17 = sbr.rel (0) target = $region5
    $region4: #{tpu_custom_call.1} parent=1 // pred_region
      _
    $region5: #{tpu_custom_call.1} parent=1 // pred_fallthru
      _
    // Predicated region
    $region6: #{tpu_custom_call.1} parent=1 // pred_check
      _
    $region7: #{tpu_custom_call.1} parent=1 // pred_check_branch
      %19 = sbr.rel (0) target = $region9
    $region8: #{tpu_custom_call.1} parent=1 // pred_region
      _
    $region9: #{tpu_custom_call.1} parent=1 // pred_fallthru
      _
    // Predicated region
    $region10: #{tpu_custom_call.1} parent=1 // pred_check
      _
    $region11: #{tpu_custom_call.1} parent=1 // pred_check_branch
      %21 = sbr.rel (0) target = $region13
    $region12: #{tpu_custom_call.1} parent=1 // pred_region
      _
    $region13: #{tpu_custom_call.1} parent=1 // pred_fallthru
      _
    // Predicated region
    $region14: #{tpu_custom_call.1} parent=1 // pred_check
      _
    $region15: #{tpu_custom_call.1} parent=1 // pred_check_branch
      %23 = sbr.rel (0) target = $region17
    $region16: #{tpu_custom_call.1} parent=1 // pred_region
      _
    $region17: #{tpu_custom_call.1} parent=1 // pred_fallthru
      _
    // Predicated region
    $region18: #{tpu_custom_call.1} parent=1 // pred_check
      _
    $region19: #{tpu_custom_call.1} parent=1 // pred_check_branch
      %25 = sbr.rel (0) target = $region21
    $region20: #{tpu_custom_call.1} parent=1 // pred_region
      _
    $region21: #{tpu_custom_call.1} parent=1 // pred_fallthru
      _
    // Predicated region
    $region22: #{tpu_custom_call.1} parent=1 // pred_check
      _
    $region23: #{tpu_custom_call.1} parent=1 // pred_check_branch
      %27 = sbr.rel (0) target = $region25
    $region24: #{tpu_custom_call.1} parent=1 // pred_region
      _
    $region25: #{tpu_custom_call.1} parent=1 // pred_fallthru
      _
    // Predicated region
    $region26: #{tpu_custom_call.1} parent=1 // pred_check
      _
    $region27: #{tpu_custom_call.1} parent=1 // pred_check_branch
      %29 = sbr.rel (0) target = $region29
    $region28: #{tpu_custom_call.1} parent=1 // pred_region
      _
    $region29: #{tpu_custom_call.1} parent=1 // pred_fallthru
      _
    // Predicated region
    $region30: #{tpu_custom_call.1} parent=1 // pred_check
      _
    $region31: #{tpu_custom_call.1} parent=1 // pred_check_branch
      %31 = sbr.rel (0) target = $region33
    $region32: #{tpu_custom_call.1} parent=1 // pred_region
      _
    $region33: #{tpu_custom_call.1} parent=1 // pred_fallthru
      _
    // Predicated region
    $region34: #{tpu_custom_call.1} parent=1 // pred_check
      _
    $region35: #{tpu_custom_call.1} parent=1 // pred_check_branch
      %33 = sbr.rel (0) target = $region37
    $region36: #{tpu_custom_call.1} parent=1 // pred_region
      _
    $region37: #{tpu_custom_call.1} parent=1 // pred_fallthru
      _
    // Predicated region
    $region38: #{tpu_custom_call.1} parent=1 // pred_check
      _
    $region39: #{tpu_custom_call.1} parent=1 // pred_check_branch
      %35 = sbr.rel (0) target = $region41
    $region40: #{tpu_custom_call.1} parent=1 // pred_region
      _
    $region41: #{tpu_custom_call.1} parent=1 // pred_fallthru
      _
    %v37 = vlaneseq
    %v38 = vand.u32 %v37, 127
    %v39 = vadd.s32 %v38, 128
    %v40 = vadd.s32 %v38, 256
    %v41 = vadd.s32 %v38, 384
    %v42 = vcvt.s32.f32 %v38
    %v43 = vcvt.s32.f32 %v39
    %v44 = vcvt.s32.f32 %v40
    %v45 = vcvt.s32.f32 %v41
    %v46 = vadd.f32 %v42, 0.5
    %v47 = vadd.f32 %v43, 0.5
    %v48 = vadd.f32 %v44, 0.5
    %v49 = vadd.f32 %v45, 0.5
    %v50 = vmul.f32 %v46, 0.0625
    %v51 = vmul.f32 %v47, 0.0625
    %v52 = vmul.f32 %v48, 0.0625
    %v53 = vmul.f32 %v49, 0.0625
    %v54 = vfloor.f32 %v50
    %v55 = vfloor.f32 %v51
    %v56 = vfloor.f32 %v52
    %v57 = vfloor.f32 %v53
    %v58 = vmul.f32 %v54, 16.0
    %v59 = vmul.f32 %v55, 16.0
    %v60 = vmul.f32 %v56, 16.0
    %v61 = vmul.f32 %v57, 16.0
    %v62 = vsub.f32 %v42, %v58
    %v63 = vsub.f32 %v43, %v59
    %v64 = vsub.f32 %v44, %v60
    %v65 = vsub.f32 %v45, %v61
    %v66 = vadd.f32 %v54, 0.5
    %v67 = vadd.f32 %v55, 0.5
    %v68 = vadd.f32 %v56, 0.5
    %v69 = vadd.f32 %v57, 0.5
    %v70 = vmul.f32 %v66, 0.0625
    %v71 = vmul.f32 %v67, 0.0625
    %v72 = vmul.f32 %v68, 0.0625
    %v73 = vmul.f32 %v69, 0.0625
    %v74 = vfloor.f32 %v70
    %v75 = vfloor.f32 %v71
    %v76 = vfloor.f32 %v72
    %v77 = vfloor.f32 %v73
    %v78 = vmul.f32 %v74, 16.0
    %v79 = vmul.f32 %v75, 16.0
    %v80 = vmul.f32 %v76, 16.0
    %v81 = vmul.f32 %v77, 16.0
    %v82 = vsub.f32 %v54, %v78
    %v83 = vsub.f32 %v55, %v79
    %v84 = vsub.f32 %v56, %v80
    %v85 = vsub.f32 %v57, %v81
    %vm86 = vcmp.ge.f32.partialorder %v82, 0.5
    %vm87 = vcmp.ge.f32.partialorder %v83, 0.5
    %vm88 = vcmp.ge.f32.partialorder %v84, 0.5
    %vm89 = vcmp.ge.f32.partialorder %v85, 0.5
    %v90 = vsel %vm86, 1, 0
    %v91 = vsel %vm87, 1, 0
    %v92 = vsel %vm88, 1, 0
    %v93 = vsel %vm89, 1, 0
    %v94 = vcvt.s32.f32 %v90
    %v95 = vcvt.s32.f32 %v91
    %v96 = vcvt.s32.f32 %v92
    %v97 = vcvt.s32.f32 %v93
    %vm98 = vcmp.le.f32.partialorder %v82, 14.5
    %vm99 = vcmp.le.f32.partialorder %v83, 14.5
    %vm100 = vcmp.le.f32.partialorder %v84, 14.5
    %vm101 = vcmp.le.f32.partialorder %v85, 14.5
    %v102 = vsel %vm98, 1, 0
    %v103 = vsel %vm99, 1, 0
    %v104 = vsel %vm100, 1, 0
    %v105 = vsel %vm101, 1, 0
    %v106 = vcvt.s32.f32 %v102
    %v107 = vcvt.s32.f32 %v103
    %v108 = vcvt.s32.f32 %v104
    %v109 = vcvt.s32.f32 %v105
    %vm110 = vcmp.ge.f32.partialorder %v62, 0.5
    %vm111 = vcmp.ge.f32.partialorder %v63, 0.5
    %vm112 = vcmp.ge.f32.partialorder %v64, 0.5
    %vm113 = vcmp.ge.f32.partialorder %v65, 0.5
    %v114 = vsel %vm110, 1, 0
    %v115 = vsel %vm111, 1, 0
    %v116 = vsel %vm112, 1, 0
    %v117 = vsel %vm113, 1, 0
    %v118 = vcvt.s32.f32 %v114
    %v119 = vcvt.s32.f32 %v115
    %v120 = vcvt.s32.f32 %v116
    %v121 = vcvt.s32.f32 %v117
    %vm122 = vcmp.le.f32.partialorder %v62, 14.5
    %vm123 = vcmp.le.f32.partialorder %v63, 14.5
    %vm124 = vcmp.le.f32.partialorder %v64, 14.5
    %vm125 = vcmp.le.f32.partialorder %v65, 14.5
    %v126 = vsel %vm122, 1, 0
    %v127 = vsel %vm123, 1, 0
    %v128 = vsel %vm124, 1, 0
    %v129 = vsel %vm125, 1, 0
    %v130 = vcvt.s32.f32 %v126
    %v131 = vcvt.s32.f32 %v127
    %v132 = vcvt.s32.f32 %v128
    %v133 = vcvt.s32.f32 %v129
    %v134 = vmul.f32 %v94, %v118
    %v135 = vmul.f32 %v95, %v119
    %v136 = vmul.f32 %v96, %v120
    %v137 = vmul.f32 %v97, %v121
    %v138 = vmul.f32 %v94, %v130
    %v139 = vmul.f32 %v95, %v131
    %v140 = vmul.f32 %v96, %v132
    %v141 = vmul.f32 %v97, %v133
    %v142 = vmul.f32 %v106, %v118
    %v143 = vmul.f32 %v107, %v119
    %v144 = vmul.f32 %v108, %v120
    %v145 = vmul.f32 %v109, %v121
    %v146 = vmul.f32 %v106, %v130
    %v147 = vmul.f32 %v107, %v131
    %v148 = vmul.f32 %v108, %v132
    %v149 = vmul.f32 %v109, %v133
    %v150 = vmul.f32 %v46, 0.00390625
    %v151 = vmul.f32 %v47, 0.00390625
    %v152 = vmul.f32 %v48, 0.00390625
    %v153 = vmul.f32 %v49, 0.00390625
    %v154 = vfloor.f32 %v150
    %v155 = vfloor.f32 %v151
    %v156 = vfloor.f32 %v152
    %v157 = vfloor.f32 %v153
    %vm158 = vcmp.eq.f32.partialorder %v154, 0.0
    %vm159 = vcmp.eq.f32.partialorder %v155, 0.0
    %vm160 = vcmp.eq.f32.partialorder %v156, 0.0
    %vm161 = vcmp.eq.f32.partialorder %v157, 0.0
    %v162 = vsel %vm158, 1, 0
    %v163 = vsel %vm159, 1, 0
    %v164 = vsel %vm160, 1, 0
    %v165 = vsel %vm161, 1, 0
    %v166 = vcvt.s32.f32 %v162
    %v167 = vcvt.s32.f32 %v163
    %v168 = vcvt.s32.f32 %v164
    %v169 = vcvt.s32.f32 %v165
    %vm170 = vcmp.eq.f32.partialorder %v154, 1.0
    %vm171 = vcmp.eq.f32.partialorder %v155, 1.0
    %vm172 = vcmp.eq.f32.partialorder %v156, 1.0
    %vm173 = vcmp.eq.f32.partialorder %v157, 1.0
    %v174 = vsel %vm170, 1, 0
    %v175 = vsel %vm171, 1, 0
    %v176 = vsel %vm172, 1, 0
    %v177 = vsel %vm173, 1, 0
    %v178 = vcvt.s32.f32 %v174
    %v179 = vcvt.s32.f32 %v175
    %v180 = vcvt.s32.f32 %v176
    %v181 = vcvt.s32.f32 %v177
    %v182 = vld [vmem:[%s0] sm:$0xff]
    %v183 = vld [vmem:[%s0 + $0x8] sm:$0xff]
    %v184 = vunpack.c.l.bf16 %v182
    %v185 = vunpack.c.h.bf16 %v182
    %v186 = vunpack.c.l.bf16 %v183
    %v187 = vunpack.c.h.bf16 %v183
    %188 = vrot.lane.b32.xlu0 %v184, 17
    %v189 = vpop.permute.xlu0 %188
    %190 = vrot.lane.b32.xlu0 %v185, 17
    %v191 = vpop.permute.xlu0 %190
    %192 = vrot.lane.b32.xlu0 %v186, 17
    %v193 = vpop.permute.xlu0 %192
    %194 = vrot.lane.b32.xlu0 %v187, 17
    %v195 = vpop.permute.xlu0 %194
    %vm196 = vcmp.lt.s32.totalorder %v38, 17
    %v197 = vsel %vm196, %v193, %v195
    %v198 = vsel %vm196, %v191, %v193
    %v199 = vsel %vm196, %v189, %v191
    %v200 = vsel %vm196, %v195, %v189
    %v201 = vmul.f32 %v200, %v134
    %v202 = vmul.f32 %v199, %v135
    %v203 = vmul.f32 %v198, %v136
    %v204 = vmul.f32 %v197, %v137
    %205 = vrot.lane.b32.xlu0 %v184, 16
    %v206 = vpop.permute.xlu0 %205
    %207 = vrot.lane.b32.xlu0 %v185, 16
    %v208 = vpop.permute.xlu0 %207
    %209 = vrot.lane.b32.xlu0 %v186, 16
    %v210 = vpop.permute.xlu0 %209
    %211 = vrot.lane.b32.xlu0 %v187, 16
    %v212 = vpop.permute.xlu0 %211
    %vm213 = vcmp.lt.s32.totalorder %v38, 16
    %v214 = vsel %vm213, %v210, %v212
    %v215 = vsel %vm213, %v208, %v210
    %v216 = vsel %vm213, %v206, %v208
    %v217 = vsel %vm213, %v212, %v206
    %v218 = vmul.f32 %v217, %v94
    %v219 = vmul.f32 %v216, %v95
    %v220 = vmul.f32 %v215, %v96
    %v221 = vmul.f32 %v214, %v97
    %222 = vrot.lane.b32.xlu0 %v184, 15
    %v223 = vpop.permute.xlu0 %222
    %224 = vrot.lane.b32.xlu0 %v185, 15
    %v225 = vpop.permute.xlu0 %224
    %226 = vrot.lane.b32.xlu0 %v186, 15
    %v227 = vpop.permute.xlu0 %226
    %228 = vrot.lane.b32.xlu0 %v187, 15
    %v229 = vpop.permute.xlu0 %228
    %vm230 = vcmp.lt.s32.totalorder %v38, 15
    %v231 = vsel %vm230, %v227, %v229
    %v232 = vsel %vm230, %v225, %v227
    %v233 = vsel %vm230, %v223, %v225
    %v234 = vsel %vm230, %v229, %v223
    %v235 = vmul.f32 %v234, %v138
    %v236 = vmul.f32 %v233, %v139
    %v237 = vmul.f32 %v232, %v140
    %v238 = vmul.f32 %v231, %v141
    %239 = vrot.lane.b32.xlu0 %v184, 1
    %v240 = vpop.permute.xlu0 %239
    %241 = vrot.lane.b32.xlu0 %v185, 1
    %v242 = vpop.permute.xlu0 %241
    %243 = vrot.lane.b32.xlu0 %v186, 1
    %v244 = vpop.permute.xlu0 %243
    %245 = vrot.lane.b32.xlu0 %v187, 1
    %v246 = vpop.permute.xlu0 %245
    %vm247 = vcmp.lt.s32.totalorder %v38, 1
    %v248 = vsel %vm247, %v244, %v246
    %v249 = vsel %vm247, %v242, %v244
    %v250 = vsel %vm247, %v240, %v242
    %v251 = vsel %vm247, %v246, %v240
    %v252 = vmul.f32 %v251, %v118
    %v253 = vmul.f32 %v250, %v119
    %v254 = vmul.f32 %v249, %v120
    %v255 = vmul.f32 %v248, %v121
    %256 = vrot.lane.b32.xlu0 %v184, 127
    %v257 = vpop.permute.xlu0 %256
    %258 = vrot.lane.b32.xlu0 %v185, 127
    %v259 = vpop.permute.xlu0 %258
    %260 = vrot.lane.b32.xlu0 %v186, 127
    %v261 = vpop.permute.xlu0 %260
    %262 = vrot.lane.b32.xlu0 %v187, 127
    %v263 = vpop.permute.xlu0 %262
    %vm264 = vcmp.lt.s32.totalorder %v38, 127
    %v265 = vsel %vm264, %v261, %v263
    %v266 = vsel %vm264, %v259, %v261
    %v267 = vsel %vm264, %v257, %v259
    %v268 = vsel %vm264, %v263, %v257
    %v269 = vmul.f32 %v267, %v130
    %v270 = vmul.f32 %v266, %v131
    %v271 = vmul.f32 %v265, %v132
    %v272 = vmul.f32 %v268, %v133
    %273 = vrot.lane.b32.xlu0 %v184, 113
    %v274 = vpop.permute.xlu0 %273
    %275 = vrot.lane.b32.xlu0 %v185, 113
    %v276 = vpop.permute.xlu0 %275
    %277 = vrot.lane.b32.xlu0 %v186, 113
    %v278 = vpop.permute.xlu0 %277
    %279 = vrot.lane.b32.xlu0 %v187, 113
    %v280 = vpop.permute.xlu0 %279
    %vm281 = vcmp.lt.s32.totalorder %v38, 113
    %v282 = vsel %vm281, %v278, %v280
    %v283 = vsel %vm281, %v276, %v278
    %v284 = vsel %vm281, %v274, %v276
    %v285 = vsel %vm281, %v280, %v274
    %v286 = vmul.f32 %v284, %v142
    %v287 = vmul.f32 %v283, %v143
    %v288 = vmul.f32 %v282, %v144
    %v289 = vmul.f32 %v285, %v145
    %290 = vrot.lane.b32.xlu0 %v184, 112
    %v291 = vpop.permute.xlu0 %290
    %292 = vrot.lane.b32.xlu0 %v185, 112
    %v293 = vpop.permute.xlu0 %292
    %294 = vrot.lane.b32.xlu0 %v186, 112
    %v295 = vpop.permute.xlu0 %294
    %296 = vrot.lane.b32.xlu0 %v187, 112
    %v297 = vpop.permute.xlu0 %296
    %vm298 = vcmp.lt.s32.totalorder %v38, 112
    %v299 = vsel %vm298, %v295, %v297
    %v300 = vsel %vm298, %v293, %v295
    %v301 = vsel %vm298, %v291, %v293
    %v302 = vsel %vm298, %v297, %v291
    %v303 = vmul.f32 %v301, %v106
    %v304 = vmul.f32 %v300, %v107
    %v305 = vmul.f32 %v299, %v108
    %v306 = vmul.f32 %v302, %v109
    %307 = vrot.lane.b32.xlu0 %v184, 111
    %v308 = vpop.permute.xlu0 %307
    %309 = vrot.lane.b32.xlu0 %v185, 111
    %v310 = vpop.permute.xlu0 %309
    %311 = vrot.lane.b32.xlu0 %v186, 111
    %v312 = vpop.permute.xlu0 %311
    %313 = vrot.lane.b32.xlu0 %v187, 111
    %v314 = vpop.permute.xlu0 %313
    %vm315 = vcmp.lt.s32.totalorder %v38, 111
    %v316 = vsel %vm315, %v312, %v314
    %v317 = vsel %vm315, %v310, %v312
    %v318 = vsel %vm315, %v308, %v310
    %v319 = vsel %vm315, %v314, %v308
    %v320 = vmul.f32 %v318, %v146
    %v321 = vmul.f32 %v317, %v147
    %v322 = vmul.f32 %v316, %v148
    %v323 = vmul.f32 %v319, %v149
    %v324 = vpack.c.bf16 %v218, %v201
    %v325 = vpack.c.bf16 %v219, %v202
    %v326 = vpack.c.bf16 %v220, %v203
    %v327 = vpack.c.bf16 %v221, %v204
    %v328 = vpack.c.bf16 %v252, %v235
    %v329 = vpack.c.bf16 %v253, %v236
    %v330 = vpack.c.bf16 %v254, %v237
    %v331 = vpack.c.bf16 %v255, %v238
    %v332 = vpack.c.bf16 %v269, %v184
    %v333 = vpack.c.bf16 %v270, %v185
    %v334 = vpack.c.bf16 %v271, %v186
    %v335 = vpack.c.bf16 %v272, %v187
    %v336 = vpack.c.bf16 %v303, %v286
    %v337 = vpack.c.bf16 %v304, %v287
    %v338 = vpack.c.bf16 %v305, %v288
    %v339 = vpack.c.bf16 %v306, %v289
    %v340 = vpack.c.bf16 %v320, %v320
    %v341 = vpack.c.bf16 %v321, %v321
    %v342 = vpack.c.bf16 %v322, %v322
    %v343 = vpack.c.bf16 %v323, %v323
    %v344 = vld [vmem:[%s1] sm:$0xf]
    %vm345 = vcmask 588800
    %v347 = vsel %vm345, %v344, 0
    %vm349 = vcmask 1043456
    %v351 = vsel %vm349, %v340, 0
    %v354 = vsel %vm349, %v341, 0
    %v357 = vsel %vm349, %v342, 0
    %v360 = vsel %vm349, %v343, 0
    %362 = vmatprep.subr.bf16.mxu0 0
    %363 = vmatpush1.bf16.msra.mxu0 0
    %364 = vmatprep.subr.bf16.mxu0 0
    %365 = vmatpush1.bf16.msra.mxu0 0
    %366 = vmatprep.subr.bf16.mxu0 0
    %367 = vmatpush1.bf16.msra.mxu0 0
    %368 = vmatprep.subr.bf16.mxu0 %v354
    %369 = vmatpush1.bf16.msra.mxu0 %v351
    %370 = vmatprep.subr.bf16.mxu0 %v337
    %371 = vmatpush1.bf16.msra.mxu0 %v336
    %372 = vmatprep.subr.bf16.mxu0 %v333
    %373 = vmatpush1.bf16.msra.mxu0 %v332
    %374 = vmatprep.subr.bf16.mxu0 %v329
    %375 = vmatpush1.bf16.msra.mxu0 %v328
    %376 = vmatprep.subr.bf16.mxu0 %v325
    %377 = vmatpush1.bf16.msra.mxu0 %v324
    %378 = vmatprep.subr.bf16.mxu0 0
    %379 = vmatpush2.bf16.msra.mxu0 0
    %380 = vmatprep.subr.bf16.mxu0 0
    %381 = vmatpush2.bf16.msra.mxu0 0
    %382 = vmatprep.subr.bf16.mxu0 0
    %383 = vmatpush2.bf16.msra.mxu0 0
    %384 = vmatprep.subr.bf16.mxu0 0
    %385 = vmatpush2.bf16.msra.mxu0 0
    %386 = vmatprep.subr.bf16.mxu0 0
    %387 = vmatpush2.bf16.msra.mxu0 0
    %388 = vmatprep.subr.bf16.mxu0 0
    %389 = vmatpush2.bf16.msra.mxu0 0
    %390 = vmatprep.subr.bf16.mxu0 0
    %391 = vmatpush2.bf16.msra.mxu0 0
    %392 = vmatprep.subr.bf16.mxu0 0
    %393 = vmatpush2.bf16.msra.mxu0 0
    %394 = vmatprep.mubr.bf16.mxu0 0
    %395 = vmatmul.mubr.bf16.gmra.mxu0 %v347
    %v396 = vpop.f32.mrf.mxu0
    %v397 = vadd.f32 0.0, %v396
    %v398 = vpop.f32.mrf.mxu0
    %v399 = vadd.f32 0.0, %v398
    %v400 = vpop.f32.mrf.mxu0
    %v401 = vpop.f32.mrf.mxu0
    %402 = vdwg.mxu0
    %403 = vmatprep.subr.bf16.mxu0 0
    %404 = vmatpush1.bf16.msra.mxu0 0
    %405 = vmatprep.subr.bf16.mxu0 0
    %406 = vmatpush1.bf16.msra.mxu0 0
    %407 = vmatprep.subr.bf16.mxu0 0
    %408 = vmatpush1.bf16.msra.mxu0 0
    %409 = vmatprep.subr.bf16.mxu0 %v360
    %410 = vmatpush1.bf16.msra.mxu0 %v357
    %411 = vmatprep.subr.bf16.mxu0 %v339
    %412 = vmatpush1.bf16.msra.mxu0 %v338
    %413 = vmatprep.subr.bf16.mxu0 %v335
    %414 = vmatpush1.bf16.msra.mxu0 %v334
    %415 = vmatprep.subr.bf16.mxu0 %v331
    %416 = vmatpush1.bf16.msra.mxu0 %v330
    %417 = vmatprep.subr.bf16.mxu0 %v327
    %418 = vmatpush1.bf16.msra.mxu0 %v326
    %419 = vmatprep.subr.bf16.mxu0 0
    %420 = vmatpush2.bf16.msra.mxu0 0
    %421 = vmatprep.subr.bf16.mxu0 0
    %422 = vmatpush2.bf16.msra.mxu0 0
    %423 = vmatprep.subr.bf16.mxu0 0
    %424 = vmatpush2.bf16.msra.mxu0 0
    %425 = vmatprep.subr.bf16.mxu0 0
    %426 = vmatpush2.bf16.msra.mxu0 0
    %427 = vmatprep.subr.bf16.mxu0 0
    %428 = vmatpush2.bf16.msra.mxu0 0
    %429 = vmatprep.subr.bf16.mxu0 0
    %430 = vmatpush2.bf16.msra.mxu0 0
    %431 = vmatprep.subr.bf16.mxu0 0
    %432 = vmatpush2.bf16.msra.mxu0 0
    %433 = vmatprep.subr.bf16.mxu0 0
    %434 = vmatpush2.bf16.msra.mxu0 0
    %435 = vmatprep.mubr.bf16.mxu0 0
    %436 = vmatmul.mubr.bf16.gmra.mxu0 %v347
    %v437 = vpop.f32.mrf.mxu0
    %v438 = vadd.f32 0.0, %v437
    %v439 = vpop.f32.mrf.mxu0
    %v440 = vadd.f32 0.0, %v439
    %v441 = vpop.f32.mrf.mxu0
    %v442 = vpop.f32.mrf.mxu0
    %443 = vdwg.mxu0
    %v444 = vld [vmem:[%s2] sm:$0xff]
    %v445 = vld [vmem:[%s3] sm:$0xff]
    %v446 = vrot.slane %v397, 4
    %v447 = vadd.f32 %v397, %v446
    %v448 = vrot.slane %v447, 2
    %v449 = vadd.f32 %v447, %v448
    %v450 = vrot.slane %v449, 1
    %v451 = vadd.f32 %v449, %v450
    %v452 = vrot.slane %v399, 4
    %v453 = vadd.f32 %v399, %v452
    %v454 = vrot.slane %v453, 2
    %v455 = vadd.f32 %v453, %v454
    %v456 = vrot.slane %v455, 1
    %v457 = vadd.f32 %v455, %v456
    %v458 = vrot.slane %v438, 4
    %v459 = vadd.f32 %v438, %v458
    %v460 = vrot.slane %v459, 2
    %v461 = vadd.f32 %v459, %v460
    %v462 = vrot.slane %v461, 1
    %v463 = vadd.f32 %v461, %v462
    %v464 = vrot.slane %v440, 4
    %v465 = vadd.f32 %v440, %v464
    %v466 = vrot.slane %v465, 2
    %v467 = vadd.f32 %v465, %v466
    %v468 = vrot.slane %v467, 1
    %v469 = vadd.f32 %v467, %v468
    %v470 = vmul.f32 %v451, %v166
    %v471 = vmul.f32 %v457, %v167
    %v472 = vmul.f32 %v463, %v168
    %v473 = vmul.f32 %v469, %v169
    %v474 = vadd.f32 %v470, %v471
    %v475 = vadd.f32 %v474, %v472
    %v476 = vadd.f32 %v475, %v473
    %477 = vadd.xlane.f32.xlu0 %v476
    %v478 = vpop.xlane.xlu0 %477
    %v479 = vrcp.pop 2048.0
    %v480 = vmul.f32 %v478, %v479
    %v481 = vmul.f32 %v480, %v166
    %v482 = vmul.f32 %v480, %v167
    %v483 = vmul.f32 %v480, %v168
    %v484 = vmul.f32 %v480, %v169
    %v485 = vadd.f32 %v481, 0.0
    %v486 = vadd.f32 %v482, 0.0
    %v487 = vadd.f32 %v483, 0.0
    %v488 = vadd.f32 %v484, 0.0
    %v489 = vmul.f32 %v451, %v178
    %v490 = vmul.f32 %v457, %v179
    %v491 = vmul.f32 %v463, %v180
    %v492 = vmul.f32 %v469, %v181
    %v493 = vadd.f32 %v489, %v490
    %v494 = vadd.f32 %v493, %v491
    %v495 = vadd.f32 %v494, %v492
    %496 = vadd.xlane.f32.xlu0 %v495
    %v497 = vpop.xlane.xlu0 %496
    %v498 = vmul.f32 %v497, %v479
    %v499 = vmul.f32 %v498, %v178
    %v500 = vmul.f32 %v498, %v179
    %v501 = vmul.f32 %v498, %v180
    %v502 = vmul.f32 %v498, %v181
    %v503 = vadd.f32 %v485, %v499
    %v504 = vadd.f32 %v486, %v500
    %v505 = vadd.f32 %v487, %v501
    %v506 = vadd.f32 %v488, %v502
    %v507 = vsub.f32 %v397, %v503
    %v508 = vsub.f32 %v399, %v504
    %v509 = vsub.f32 %v438, %v505
    %v510 = vsub.f32 %v440, %v506
    %v511 = vmul.f32 %v507, %v507
    %v512 = vmul.f32 %v508, %v508
    %v513 = vmul.f32 %v509, %v509
    %v514 = vmul.f32 %v510, %v510
    %v515 = vrot.slane %v511, 4
    %v516 = vadd.f32 %v511, %v515
    %v517 = vrot.slane %v516, 2
    %v518 = vadd.f32 %v516, %v517
    %v519 = vrot.slane %v518, 1
    %v520 = vadd.f32 %v518, %v519
    %v521 = vrot.slane %v512, 4
    %v522 = vadd.f32 %v512, %v521
    %v523 = vrot.slane %v522, 2
    %v524 = vadd.f32 %v522, %v523
    %v525 = vrot.slane %v524, 1
    %v526 = vadd.f32 %v524, %v525
    %v527 = vrot.slane %v513, 4
    %v528 = vadd.f32 %v513, %v527
    %v529 = vrot.slane %v528, 2
    %v530 = vadd.f32 %v528, %v529
    %v531 = vrot.slane %v530, 1
    %v532 = vadd.f32 %v530, %v531
    %v533 = vrot.slane %v514, 4
    %v534 = vadd.f32 %v514, %v533
    %v535 = vrot.slane %v534, 2
    %v536 = vadd.f32 %v534, %v535
    %v537 = vrot.slane %v536, 1
    %v538 = vadd.f32 %v536, %v537
    %v539 = vmul.f32 %v520, %v166
    %v540 = vmul.f32 %v526, %v167
    %v541 = vmul.f32 %v532, %v168
    %v542 = vmul.f32 %v538, %v169
    %v543 = vadd.f32 %v539, %v540
    %v544 = vadd.f32 %v543, %v541
    %v545 = vadd.f32 %v544, %v542
    %546 = vadd.xlane.f32.xlu0 %v545
    %v547 = vpop.xlane.xlu0 %546
    %v548 = vmul.f32 %v547, %v479
    %v549 = vadd.f32 %v548, 1e-05
    %v550 = vrsqrt.pop %v549
    %v551 = vmul.f32 %v550, %v166
    %v552 = vmul.f32 %v550, %v167
    %v553 = vmul.f32 %v550, %v168
    %v554 = vmul.f32 %v550, %v169
    %v555 = vadd.f32 %v551, 0.0
    %v556 = vadd.f32 %v552, 0.0
    %v557 = vadd.f32 %v553, 0.0
    %v558 = vadd.f32 %v554, 0.0
    %v559 = vmul.f32 %v520, %v178
    %v560 = vmul.f32 %v526, %v179
    %v561 = vmul.f32 %v532, %v180
    %v562 = vmul.f32 %v538, %v181
    %v563 = vadd.f32 %v559, %v560
    %v564 = vadd.f32 %v563, %v561
    %v565 = vadd.f32 %v564, %v562
    %566 = vadd.xlane.f32.xlu0 %v565
    %v567 = vpop.xlane.xlu0 %566
    %v568 = vmul.f32 %v567, %v479
    %v569 = vadd.f32 %v568, 1e-05
    %v570 = vrsqrt.pop %v569
    %v571 = vmul.f32 %v570, %v178
    %v572 = vmul.f32 %v570, %v179
    %v573 = vmul.f32 %v570, %v180
    %v574 = vmul.f32 %v570, %v181
    %v575 = vadd.f32 %v555, %v571
    %v576 = vadd.f32 %v556, %v572
    %v577 = vadd.f32 %v557, %v573
    %v578 = vadd.f32 %v558, %v574
    %580 = vset.pattern.permute.xlu0 0
    %581 = vperm.xlu0 %580, %v444
    %v582 = vpop.permute.xlu0 %581
    %v584 = vmul.f32 %v575, %v582
    %v585 = vmul.f32 %v576, %v582
    %v586 = vmul.f32 %v577, %v582
    %v587 = vmul.f32 %v578, %v582
    %v588 = vmul.f32 %v507, %v584
    %v589 = vmul.f32 %v508, %v585
    %v590 = vmul.f32 %v509, %v586
    %v591 = vmul.f32 %v510, %v587
    %593 = vset.pattern.permute.xlu0 0
    %594 = vperm.xlu0 %593, %v445
    %v595 = vpop.permute.xlu0 %594
    %v597 = vadd.f32 %v588, %v595
    %v598 = vadd.f32 %v589, %v595
    %v599 = vadd.f32 %v590, %v595
    %v600 = vadd.f32 %v591, %v595
    %v601 = vmax.f32 %v597, 0.0
    %v602 = vmax.f32 %v598, 0.0
    %v603 = vmax.f32 %v599, 0.0
    %v604 = vmax.f32 %v600, 0.0
    %605 = vrot.lane.b32.xlu0 %v601, 17
    %v606 = vpop.permute.xlu0 %605
    %607 = vrot.lane.b32.xlu0 %v602, 17
    %v608 = vpop.permute.xlu0 %607
    %609 = vrot.lane.b32.xlu0 %v603, 17
    %v610 = vpop.permute.xlu0 %609
    %611 = vrot.lane.b32.xlu0 %v604, 17
    %v612 = vpop.permute.xlu0 %611
    %v613 = vsel %vm196, %v610, %v612
    %v614 = vsel %vm196, %v608, %v610
    %v615 = vsel %vm196, %v606, %v608
    %v616 = vsel %vm196, %v612, %v606
    %v617 = vmul.f32 %v616, %v134
    %v618 = vmul.f32 %v615, %v135
    %v619 = vmul.f32 %v614, %v136
    %v620 = vmul.f32 %v613, %v137
    %621 = vrot.lane.b32.xlu0 %v601, 16
    %v622 = vpop.permute.xlu0 %621
    %623 = vrot.lane.b32.xlu0 %v602, 16
    %v624 = vpop.permute.xlu0 %623
    %625 = vrot.lane.b32.xlu0 %v603, 16
    %v626 = vpop.permute.xlu0 %625
    %627 = vrot.lane.b32.xlu0 %v604, 16
    %v628 = vpop.permute.xlu0 %627
    %v629 = vsel %vm213, %v626, %v628
    %v630 = vsel %vm213, %v624, %v626
    %v631 = vsel %vm213, %v622, %v624
    %v632 = vsel %vm213, %v628, %v622
    %v633 = vmul.f32 %v632, %v94
    %v634 = vmul.f32 %v631, %v95
    %v635 = vmul.f32 %v630, %v96
    %v636 = vmul.f32 %v629, %v97
    %637 = vrot.lane.b32.xlu0 %v601, 15
    %v638 = vpop.permute.xlu0 %637
    %639 = vrot.lane.b32.xlu0 %v602, 15
    %v640 = vpop.permute.xlu0 %639
    %641 = vrot.lane.b32.xlu0 %v603, 15
    %v642 = vpop.permute.xlu0 %641
    %643 = vrot.lane.b32.xlu0 %v604, 15
    %v644 = vpop.permute.xlu0 %643
    %v645 = vsel %vm230, %v642, %v644
    %v646 = vsel %vm230, %v640, %v642
    %v647 = vsel %vm230, %v638, %v640
    %v648 = vsel %vm230, %v644, %v638
    %v649 = vmul.f32 %v648, %v138
    %v650 = vmul.f32 %v647, %v139
    %v651 = vmul.f32 %v646, %v140
    %v652 = vmul.f32 %v645, %v141
    %653 = vrot.lane.b32.xlu0 %v601, 1
    %v654 = vpop.permute.xlu0 %653
    %655 = vrot.lane.b32.xlu0 %v602, 1
    %v656 = vpop.permute.xlu0 %655
    %657 = vrot.lane.b32.xlu0 %v603, 1
    %v658 = vpop.permute.xlu0 %657
    %659 = vrot.lane.b32.xlu0 %v604, 1
    %v660 = vpop.permute.xlu0 %659
    %v661 = vsel %vm247, %v658, %v660
    %v662 = vsel %vm247, %v656, %v658
    %v663 = vsel %vm247, %v654, %v656
    %v664 = vsel %vm247, %v660, %v654
    %v665 = vmul.f32 %v664, %v118
    %v666 = vmul.f32 %v663, %v119
    %v667 = vmul.f32 %v662, %v120
    %v668 = vmul.f32 %v661, %v121
    %669 = vrot.lane.b32.xlu0 %v601, 127
    %v670 = vpop.permute.xlu0 %669
    %671 = vrot.lane.b32.xlu0 %v602, 127
    %v672 = vpop.permute.xlu0 %671
    %673 = vrot.lane.b32.xlu0 %v603, 127
    %v674 = vpop.permute.xlu0 %673
    %675 = vrot.lane.b32.xlu0 %v604, 127
    %v676 = vpop.permute.xlu0 %675
    %v677 = vsel %vm264, %v674, %v676
    %v678 = vsel %vm264, %v672, %v674
    %v679 = vsel %vm264, %v670, %v672
    %v680 = vsel %vm264, %v676, %v670
    %v681 = vmul.f32 %v679, %v130
    %v682 = vmul.f32 %v678, %v131
    %v683 = vmul.f32 %v677, %v132
    %v684 = vmul.f32 %v680, %v133
    %685 = vrot.lane.b32.xlu0 %v601, 113
    %v686 = vpop.permute.xlu0 %685
    %687 = vrot.lane.b32.xlu0 %v602, 113
    %v688 = vpop.permute.xlu0 %687
    %689 = vrot.lane.b32.xlu0 %v603, 113
    %v690 = vpop.permute.xlu0 %689
    %691 = vrot.lane.b32.xlu0 %v604, 113
    %v692 = vpop.permute.xlu0 %691
    %v693 = vsel %vm281, %v690, %v692
    %v694 = vsel %vm281, %v688, %v690
    %v695 = vsel %vm281, %v686, %v688
    %v696 = vsel %vm281, %v692, %v686
    %v697 = vmul.f32 %v695, %v142
    %v698 = vmul.f32 %v694, %v143
    %v699 = vmul.f32 %v693, %v144
    %v700 = vmul.f32 %v696, %v145
    %701 = vrot.lane.b32.xlu0 %v601, 112
    %v702 = vpop.permute.xlu0 %701
    %703 = vrot.lane.b32.xlu0 %v602, 112
    %v704 = vpop.permute.xlu0 %703
    %705 = vrot.lane.b32.xlu0 %v603, 112
    %v706 = vpop.permute.xlu0 %705
    %707 = vrot.lane.b32.xlu0 %v604, 112
    %v708 = vpop.permute.xlu0 %707
    %v709 = vsel %vm298, %v706, %v708
    %v710 = vsel %vm298, %v704, %v706
    %v711 = vsel %vm298, %v702, %v704
    %v712 = vsel %vm298, %v708, %v702
    %v713 = vmul.f32 %v711, %v106
    %v714 = vmul.f32 %v710, %v107
    %v715 = vmul.f32 %v709, %v108
    %v716 = vmul.f32 %v712, %v109
    %717 = vrot.lane.b32.xlu0 %v601, 111
    %v718 = vpop.permute.xlu0 %717
    %719 = vrot.lane.b32.xlu0 %v602, 111
    %v720 = vpop.permute.xlu0 %719
    %721 = vrot.lane.b32.xlu0 %v603, 111
    %v722 = vpop.permute.xlu0 %721
    %723 = vrot.lane.b32.xlu0 %v604, 111
    %v724 = vpop.permute.xlu0 %723
    %v725 = vsel %vm315, %v722, %v724
    %v726 = vsel %vm315, %v720, %v722
    %v727 = vsel %vm315, %v718, %v720
    %v728 = vsel %vm315, %v724, %v718
    %v729 = vmul.f32 %v727, %v146
    %v730 = vmul.f32 %v726, %v147
    %v731 = vmul.f32 %v725, %v148
    %v732 = vmul.f32 %v728, %v149
    %v733 = vpack.c.bf16 %v633, %v617
    %v734 = vpack.c.bf16 %v634, %v618
    %v735 = vpack.c.bf16 %v635, %v619
    %v736 = vpack.c.bf16 %v636, %v620
    %v737 = vpack.c.bf16 %v665, %v649
    %v738 = vpack.c.bf16 %v666, %v650
    %v739 = vpack.c.bf16 %v667, %v651
    %v740 = vpack.c.bf16 %v668, %v652
    %v741 = vpack.c.bf16 %v681, %v601
    %v742 = vpack.c.bf16 %v682, %v602
    %v743 = vpack.c.bf16 %v683, %v603
    %v744 = vpack.c.bf16 %v684, %v604
    %v745 = vpack.c.bf16 %v713, %v697
    %v746 = vpack.c.bf16 %v714, %v698
    %v747 = vpack.c.bf16 %v715, %v699
    %v748 = vpack.c.bf16 %v716, %v700
    %v749 = vpack.c.bf16 %v729, %v729
    %v750 = vpack.c.bf16 %v730, %v730
    %v751 = vpack.c.bf16 %v731, %v731
    %v752 = vpack.c.bf16 %v732, %v732
    %v753 = vld [vmem:[%s4] sm:$0xf]
    %v755 = vsel %vm345, %v753, 0
    %v758 = vsel %vm349, %v749, 0
    %v761 = vsel %vm349, %v750, 0
    %v764 = vsel %vm349, %v751, 0
    %v767 = vsel %vm349, %v752, 0
    %769 = vmatprep.subr.bf16.mxu0 0
    %770 = vmatpush1.bf16.msra.mxu0 0
    %771 = vmatprep.subr.bf16.mxu0 0
    %772 = vmatpush1.bf16.msra.mxu0 0
    %773 = vmatprep.subr.bf16.mxu0 0
    %774 = vmatpush1.bf16.msra.mxu0 0
    %775 = vmatprep.subr.bf16.mxu0 %v761
    %776 = vmatpush1.bf16.msra.mxu0 %v758
    %777 = vmatprep.subr.bf16.mxu0 %v746
    %778 = vmatpush1.bf16.msra.mxu0 %v745
    %779 = vmatprep.subr.bf16.mxu0 %v742
    %780 = vmatpush1.bf16.msra.mxu0 %v741
    %781 = vmatprep.subr.bf16.mxu0 %v738
    %782 = vmatpush1.bf16.msra.mxu0 %v737
    %783 = vmatprep.subr.bf16.mxu0 %v734
    %784 = vmatpush1.bf16.msra.mxu0 %v733
    %785 = vmatprep.subr.bf16.mxu0 0
    %786 = vmatpush2.bf16.msra.mxu0 0
    %787 = vmatprep.subr.bf16.mxu0 0
    %788 = vmatpush2.bf16.msra.mxu0 0
    %789 = vmatprep.subr.bf16.mxu0 0
    %790 = vmatpush2.bf16.msra.mxu0 0
    %791 = vmatprep.subr.bf16.mxu0 0
    %792 = vmatpush2.bf16.msra.mxu0 0
    %793 = vmatprep.subr.bf16.mxu0 0
    %794 = vmatpush2.bf16.msra.mxu0 0
    %795 = vmatprep.subr.bf16.mxu0 0
    %796 = vmatpush2.bf16.msra.mxu0 0
    %797 = vmatprep.subr.bf16.mxu0 0
    %798 = vmatpush2.bf16.msra.mxu0 0
    %799 = vmatprep.subr.bf16.mxu0 0
    %800 = vmatpush2.bf16.msra.mxu0 0
    %801 = vmatprep.mubr.bf16.mxu0 0
    %802 = vmatmul.mubr.bf16.gmra.mxu0 %v755
    %v803 = vpop.f32.mrf.mxu0
    %v804 = vadd.f32 0.0, %v803
    %v805 = vpop.f32.mrf.mxu0
    %v806 = vadd.f32 0.0, %v805
    %v807 = vpop.f32.mrf.mxu0
    %v808 = vpop.f32.mrf.mxu0
    %809 = vdwg.mxu0
    %810 = vmatprep.subr.bf16.mxu0 0
    %811 = vmatpush1.bf16.msra.mxu0 0
    %812 = vmatprep.subr.bf16.mxu0 0
    %813 = vmatpush1.bf16.msra.mxu0 0
    %814 = vmatprep.subr.bf16.mxu0 0
    %815 = vmatpush1.bf16.msra.mxu0 0
    %816 = vmatprep.subr.bf16.mxu0 %v767
    %817 = vmatpush1.bf16.msra.mxu0 %v764
    %818 = vmatprep.subr.bf16.mxu0 %v748
    %819 = vmatpush1.bf16.msra.mxu0 %v747
    %820 = vmatprep.subr.bf16.mxu0 %v744
    %821 = vmatpush1.bf16.msra.mxu0 %v743
    %822 = vmatprep.subr.bf16.mxu0 %v740
    %823 = vmatpush1.bf16.msra.mxu0 %v739
    %824 = vmatprep.subr.bf16.mxu0 %v736
    %825 = vmatpush1.bf16.msra.mxu0 %v735
    %826 = vmatprep.subr.bf16.mxu0 0
    %827 = vmatpush2.bf16.msra.mxu0 0
    %828 = vmatprep.subr.bf16.mxu0 0
    %829 = vmatpush2.bf16.msra.mxu0 0
    %830 = vmatprep.subr.bf16.mxu0 0
    %831 = vmatpush2.bf16.msra.mxu0 0
    %832 = vmatprep.subr.bf16.mxu0 0
    %833 = vmatpush2.bf16.msra.mxu0 0
    %834 = vmatprep.subr.bf16.mxu0 0
    %835 = vmatpush2.bf16.msra.mxu0 0
    %836 = vmatprep.subr.bf16.mxu0 0
    %837 = vmatpush2.bf16.msra.mxu0 0
    %838 = vmatprep.subr.bf16.mxu0 0
    %839 = vmatpush2.bf16.msra.mxu0 0
    %840 = vmatprep.subr.bf16.mxu0 0
    %841 = vmatpush2.bf16.msra.mxu0 0
    %842 = vmatprep.mubr.bf16.mxu0 0
    %843 = vmatmul.mubr.bf16.gmra.mxu0 %v755
    %v844 = vpop.f32.mrf.mxu0
    %v845 = vadd.f32 0.0, %v844
    %v846 = vpop.f32.mrf.mxu0
    %v847 = vadd.f32 0.0, %v846
    %v848 = vpop.f32.mrf.mxu0
    %v849 = vpop.f32.mrf.mxu0
    %850 = vdwg.mxu0
    %v851 = vld [vmem:[%s5] sm:$0xff]
    %v852 = vld [vmem:[%s6] sm:$0xff]
    %v853 = vrot.slane %v804, 4
    %v854 = vadd.f32 %v804, %v853
    %v855 = vrot.slane %v854, 2
    %v856 = vadd.f32 %v854, %v855
    %v857 = vrot.slane %v856, 1
    %v858 = vadd.f32 %v856, %v857
    %v859 = vrot.slane %v806, 4
    %v860 = vadd.f32 %v806, %v859
    %v861 = vrot.slane %v860, 2
    %v862 = vadd.f32 %v860, %v861
    %v863 = vrot.slane %v862, 1
    %v864 = vadd.f32 %v862, %v863
    %v865 = vrot.slane %v845, 4
    %v866 = vadd.f32 %v845, %v865
    %v867 = vrot.slane %v866, 2
    %v868 = vadd.f32 %v866, %v867
    %v869 = vrot.slane %v868, 1
    %v870 = vadd.f32 %v868, %v869
    %v871 = vrot.slane %v847, 4
    %v872 = vadd.f32 %v847, %v871
    %v873 = vrot.slane %v872, 2
    %v874 = vadd.f32 %v872, %v873
    %v875 = vrot.slane %v874, 1
    %v876 = vadd.f32 %v874, %v875
    %v877 = vmul.f32 %v858, %v166
    %v878 = vmul.f32 %v864, %v167
    %v879 = vmul.f32 %v870, %v168
    %v880 = vmul.f32 %v876, %v169
    %v881 = vadd.f32 %v877, %v878
    %v882 = vadd.f32 %v881, %v879
    %v883 = vadd.f32 %v882, %v880
    %884 = vadd.xlane.f32.xlu0 %v883
    %v885 = vpop.xlane.xlu0 %884
    %v886 = vmul.f32 %v885, %v479
    %v887 = vmul.f32 %v886, %v166
    %v888 = vmul.f32 %v886, %v167
    %v889 = vmul.f32 %v886, %v168
    %v890 = vmul.f32 %v886, %v169
    %v891 = vadd.f32 %v887, 0.0
    %v892 = vadd.f32 %v888, 0.0
    %v893 = vadd.f32 %v889, 0.0
    %v894 = vadd.f32 %v890, 0.0
    %v895 = vmul.f32 %v858, %v178
    %v896 = vmul.f32 %v864, %v179
    %v897 = vmul.f32 %v870, %v180
    %v898 = vmul.f32 %v876, %v181
    %v899 = vadd.f32 %v895, %v896
    %v900 = vadd.f32 %v899, %v897
    %v901 = vadd.f32 %v900, %v898
    %902 = vadd.xlane.f32.xlu0 %v901
    %v903 = vpop.xlane.xlu0 %902
    %v904 = vmul.f32 %v903, %v479
    %v905 = vmul.f32 %v904, %v178
    %v906 = vmul.f32 %v904, %v179
    %v907 = vmul.f32 %v904, %v180
    %v908 = vmul.f32 %v904, %v181
    %v909 = vadd.f32 %v891, %v905
    %v910 = vadd.f32 %v892, %v906
    %v911 = vadd.f32 %v893, %v907
    %v912 = vadd.f32 %v894, %v908
    %v913 = vsub.f32 %v804, %v909
    %v914 = vsub.f32 %v806, %v910
    %v915 = vsub.f32 %v845, %v911
    %v916 = vsub.f32 %v847, %v912
    %v917 = vmul.f32 %v913, %v913
    %v918 = vmul.f32 %v914, %v914
    %v919 = vmul.f32 %v915, %v915
    %v920 = vmul.f32 %v916, %v916
    %v921 = vrot.slane %v917, 4
    %v922 = vadd.f32 %v917, %v921
    %v923 = vrot.slane %v922, 2
    %v924 = vadd.f32 %v922, %v923
    %v925 = vrot.slane %v924, 1
    %v926 = vadd.f32 %v924, %v925
    %v927 = vrot.slane %v918, 4
    %v928 = vadd.f32 %v918, %v927
    %v929 = vrot.slane %v928, 2
    %v930 = vadd.f32 %v928, %v929
    %v931 = vrot.slane %v930, 1
    %v932 = vadd.f32 %v930, %v931
    %v933 = vrot.slane %v919, 4
    %v934 = vadd.f32 %v919, %v933
    %v935 = vrot.slane %v934, 2
    %v936 = vadd.f32 %v934, %v935
    %v937 = vrot.slane %v936, 1
    %v938 = vadd.f32 %v936, %v937
    %v939 = vrot.slane %v920, 4
    %v940 = vadd.f32 %v920, %v939
    %v941 = vrot.slane %v940, 2
    %v942 = vadd.f32 %v940, %v941
    %v943 = vrot.slane %v942, 1
    %v944 = vadd.f32 %v942, %v943
    %v945 = vmul.f32 %v926, %v166
    %v946 = vmul.f32 %v932, %v167
    %v947 = vmul.f32 %v938, %v168
    %v948 = vmul.f32 %v944, %v169
    %v949 = vadd.f32 %v945, %v946
    %v950 = vadd.f32 %v949, %v947
    %v951 = vadd.f32 %v950, %v948
    %952 = vadd.xlane.f32.xlu0 %v951
    %v953 = vpop.xlane.xlu0 %952
    %v954 = vmul.f32 %v953, %v479
    %v955 = vadd.f32 %v954, 1e-05
    %v956 = vrsqrt.pop %v955
    %v957 = vmul.f32 %v956, %v166
    %v958 = vmul.f32 %v956, %v167
    %v959 = vmul.f32 %v956, %v168
    %v960 = vmul.f32 %v956, %v169
    %v961 = vadd.f32 %v957, 0.0
    %v962 = vadd.f32 %v958, 0.0
    %v963 = vadd.f32 %v959, 0.0
    %v964 = vadd.f32 %v960, 0.0
    %v965 = vmul.f32 %v926, %v178
    %v966 = vmul.f32 %v932, %v179
    %v967 = vmul.f32 %v938, %v180
    %v968 = vmul.f32 %v944, %v181
    %v969 = vadd.f32 %v965, %v966
    %v970 = vadd.f32 %v969, %v967
    %v971 = vadd.f32 %v970, %v968
    %972 = vadd.xlane.f32.xlu0 %v971
    %v973 = vpop.xlane.xlu0 %972
    %v974 = vmul.f32 %v973, %v479
    %v975 = vadd.f32 %v974, 1e-05
    %v976 = vrsqrt.pop %v975
    %v977 = vmul.f32 %v976, %v178
    %v978 = vmul.f32 %v976, %v179
    %v979 = vmul.f32 %v976, %v180
    %v980 = vmul.f32 %v976, %v181
    %v981 = vadd.f32 %v961, %v977
    %v982 = vadd.f32 %v962, %v978
    %v983 = vadd.f32 %v963, %v979
    %v984 = vadd.f32 %v964, %v980
    %986 = vset.pattern.permute.xlu0 0
    %987 = vperm.xlu0 %986, %v851
    %v988 = vpop.permute.xlu0 %987
    %v990 = vmul.f32 %v981, %v988
    %v991 = vmul.f32 %v982, %v988
    %v992 = vmul.f32 %v983, %v988
    %v993 = vmul.f32 %v984, %v988
    %v994 = vmul.f32 %v913, %v990
    %v995 = vmul.f32 %v914, %v991
    %v996 = vmul.f32 %v915, %v992
    %v997 = vmul.f32 %v916, %v993
    %999 = vset.pattern.permute.xlu0 0
    %1000 = vperm.xlu0 %999, %v852
    %v1001 = vpop.permute.xlu0 %1000
    %v1003 = vadd.f32 %v994, %v1001
    %v1004 = vadd.f32 %v995, %v1001
    %v1005 = vadd.f32 %v996, %v1001
    %v1006 = vadd.f32 %v997, %v1001
    %v1007 = vld [vmem:[%s7] sm:$0xf]
    %v1010 = vunpack.c.l.b16 %v182
    %v1011 = vunpack.c.h.b16 %v182
    %v1012 = vunpack.c.l.b16 %v183
    %v1013 = vunpack.c.h.b16 %v183
    %v1014 = vpack.c.b16 %v1010, %v1010
    %v1015 = vpack.c.b16 %v1011, %v1011
    %v1016 = vpack.c.b16 %v1012, %v1012
    %v1017 = vpack.c.b16 %v1013, %v1013
    %vm1018 = vcmask 64512
    %v1020 = vsel %vm1018, %v1007, 0
    %v1023 = vsel %vm349, %v1014, 0
    %v1026 = vsel %vm349, %v1015, 0
    %v1029 = vsel %vm349, %v1016, 0
    %v1032 = vsel %vm349, %v1017, 0
    %1034 = vmatprep.subr.bf16.mxu0 0
    %1035 = vmatpush1.bf16.msra.mxu0 0
    %1036 = vmatprep.subr.bf16.mxu0 0
    %1037 = vmatpush1.bf16.msra.mxu0 0
    %1038 = vmatprep.subr.bf16.mxu0 0
    %1039 = vmatpush1.bf16.msra.mxu0 0
    %1040 = vmatprep.subr.bf16.mxu0 0
    %1041 = vmatpush1.bf16.msra.mxu0 0
    %1042 = vmatprep.subr.bf16.mxu0 0
    %1043 = vmatpush1.bf16.msra.mxu0 0
    %1044 = vmatprep.subr.bf16.mxu0 0
    %1045 = vmatpush1.bf16.msra.mxu0 0
    %1046 = vmatprep.subr.bf16.mxu0 0
    %1047 = vmatpush1.bf16.msra.mxu0 0
    %1048 = vmatprep.subr.bf16.mxu0 %v1026
    %1049 = vmatpush1.bf16.msra.mxu0 %v1023
    %1050 = vmatprep.subr.bf16.mxu0 0
    %1051 = vmatpush2.bf16.msra.mxu0 0
    %1052 = vmatprep.subr.bf16.mxu0 0
    %1053 = vmatpush2.bf16.msra.mxu0 0
    %1054 = vmatprep.subr.bf16.mxu0 0
    %1055 = vmatpush2.bf16.msra.mxu0 0
    %1056 = vmatprep.subr.bf16.mxu0 0
    %1057 = vmatpush2.bf16.msra.mxu0 0
    %1058 = vmatprep.subr.bf16.mxu0 0
    %1059 = vmatpush2.bf16.msra.mxu0 0
    %1060 = vmatprep.subr.bf16.mxu0 0
    %1061 = vmatpush2.bf16.msra.mxu0 0
    %1062 = vmatprep.subr.bf16.mxu0 0
    %1063 = vmatpush2.bf16.msra.mxu0 0
    %1064 = vmatprep.subr.bf16.mxu0 0
    %1065 = vmatpush2.bf16.msra.mxu0 0
    %1066 = vmatprep.mubr.bf16.mxu0 0
    %1067 = vmatmul.mubr.bf16.gmra.mxu0 %v1020
    %v1068 = vpop.f32.mrf.mxu0
    %v1069 = vadd.f32 0.0, %v1068
    %v1070 = vpop.f32.mrf.mxu0
    %v1071 = vadd.f32 0.0, %v1070
    %v1072 = vpop.f32.mrf.mxu0
    %v1073 = vpop.f32.mrf.mxu0
    %1074 = vdwg.mxu0
    %1075 = vmatprep.subr.bf16.mxu0 0
    %1076 = vmatpush1.bf16.msra.mxu0 0
    %1077 = vmatprep.subr.bf16.mxu0 0
    %1078 = vmatpush1.bf16.msra.mxu0 0
    %1079 = vmatprep.subr.bf16.mxu0 0
    %1080 = vmatpush1.bf16.msra.mxu0 0
    %1081 = vmatprep.subr.bf16.mxu0 0
    %1082 = vmatpush1.bf16.msra.mxu0 0
    %1083 = vmatprep.subr.bf16.mxu0 0
    %1084 = vmatpush1.bf16.msra.mxu0 0
    %1085 = vmatprep.subr.bf16.mxu0 0
    %1086 = vmatpush1.bf16.msra.mxu0 0
    %1087 = vmatprep.subr.bf16.mxu0 0
    %1088 = vmatpush1.bf16.msra.mxu0 0
    %1089 = vmatprep.subr.bf16.mxu0 %v1032
    %1090 = vmatpush1.bf16.msra.mxu0 %v1029
    %1091 = vmatprep.subr.bf16.mxu0 0
    %1092 = vmatpush2.bf16.msra.mxu0 0
    %1093 = vmatprep.subr.bf16.mxu0 0
    %1094 = vmatpush2.bf16.msra.mxu0 0
    %1095 = vmatprep.subr.bf16.mxu0 0
    %1096 = vmatpush2.bf16.msra.mxu0 0
    %1097 = vmatprep.subr.bf16.mxu0 0
    %1098 = vmatpush2.bf16.msra.mxu0 0
    %1099 = vmatprep.subr.bf16.mxu0 0
    %1100 = vmatpush2.bf16.msra.mxu0 0
    %1101 = vmatprep.subr.bf16.mxu0 0
    %1102 = vmatpush2.bf16.msra.mxu0 0
    %1103 = vmatprep.subr.bf16.mxu0 0
    %1104 = vmatpush2.bf16.msra.mxu0 0
    %1105 = vmatprep.subr.bf16.mxu0 0
    %1106 = vmatpush2.bf16.msra.mxu0 0
    %1107 = vmatprep.mubr.bf16.mxu0 0
    %1108 = vmatmul.mubr.bf16.gmra.mxu0 %v1020
    %v1109 = vpop.f32.mrf.mxu0
    %v1110 = vadd.f32 0.0, %v1109
    %v1111 = vpop.f32.mrf.mxu0
    %v1112 = vadd.f32 0.0, %v1111
    %v1113 = vpop.f32.mrf.mxu0
    %v1114 = vpop.f32.mrf.mxu0
    %1115 = vdwg.mxu0
    %v1116 = vld [vmem:[%s8] sm:$0xff]
    %v1117 = vld [vmem:[%s9] sm:$0xff]
    %v1118 = vrot.slane %v1069, 4
    %v1119 = vadd.f32 %v1069, %v1118
    %v1120 = vrot.slane %v1119, 2
    %v1121 = vadd.f32 %v1119, %v1120
    %v1122 = vrot.slane %v1121, 1
    %v1123 = vadd.f32 %v1121, %v1122
    %v1124 = vrot.slane %v1071, 4
    %v1125 = vadd.f32 %v1071, %v1124
    %v1126 = vrot.slane %v1125, 2
    %v1127 = vadd.f32 %v1125, %v1126
    %v1128 = vrot.slane %v1127, 1
    %v1129 = vadd.f32 %v1127, %v1128
    %v1130 = vrot.slane %v1110, 4
    %v1131 = vadd.f32 %v1110, %v1130
    %v1132 = vrot.slane %v1131, 2
    %v1133 = vadd.f32 %v1131, %v1132
    %v1134 = vrot.slane %v1133, 1
    %v1135 = vadd.f32 %v1133, %v1134
    %v1136 = vrot.slane %v1112, 4
    %v1137 = vadd.f32 %v1112, %v1136
    %v1138 = vrot.slane %v1137, 2
    %v1139 = vadd.f32 %v1137, %v1138
    %v1140 = vrot.slane %v1139, 1
    %v1141 = vadd.f32 %v1139, %v1140
    %v1142 = vmul.f32 %v1123, %v166
    %v1143 = vmul.f32 %v1129, %v167
    %v1144 = vmul.f32 %v1135, %v168
    %v1145 = vmul.f32 %v1141, %v169
    %v1146 = vadd.f32 %v1142, %v1143
    %v1147 = vadd.f32 %v1146, %v1144
    %v1148 = vadd.f32 %v1147, %v1145
    %1149 = vadd.xlane.f32.xlu0 %v1148
    %v1150 = vpop.xlane.xlu0 %1149
    %v1151 = vmul.f32 %v1150, %v479
    %v1152 = vmul.f32 %v1151, %v166
    %v1153 = vmul.f32 %v1151, %v167
    %v1154 = vmul.f32 %v1151, %v168
    %v1155 = vmul.f32 %v1151, %v169
    %v1156 = vadd.f32 %v1152, 0.0
    %v1157 = vadd.f32 %v1153, 0.0
    %v1158 = vadd.f32 %v1154, 0.0
    %v1159 = vadd.f32 %v1155, 0.0
    %v1160 = vmul.f32 %v1123, %v178
    %v1161 = vmul.f32 %v1129, %v179
    %v1162 = vmul.f32 %v1135, %v180
    %v1163 = vmul.f32 %v1141, %v181
    %v1164 = vadd.f32 %v1160, %v1161
    %v1165 = vadd.f32 %v1164, %v1162
    %v1166 = vadd.f32 %v1165, %v1163
    %1167 = vadd.xlane.f32.xlu0 %v1166
    %v1168 = vpop.xlane.xlu0 %1167
    %v1169 = vmul.f32 %v1168, %v479
    %v1170 = vmul.f32 %v1169, %v178
    %v1171 = vmul.f32 %v1169, %v179
    %v1172 = vmul.f32 %v1169, %v180
    %v1173 = vmul.f32 %v1169, %v181
    %v1174 = vadd.f32 %v1156, %v1170
    %v1175 = vadd.f32 %v1157, %v1171
    %v1176 = vadd.f32 %v1158, %v1172
    %v1177 = vadd.f32 %v1159, %v1173
    %v1178 = vsub.f32 %v1069, %v1174
    %v1179 = vsub.f32 %v1071, %v1175
    %v1180 = vsub.f32 %v1110, %v1176
    %v1181 = vsub.f32 %v1112, %v1177
    %v1182 = vmul.f32 %v1178, %v1178
    %v1183 = vmul.f32 %v1179, %v1179
    %v1184 = vmul.f32 %v1180, %v1180
    %v1185 = vmul.f32 %v1181, %v1181
    %v1186 = vrot.slane %v1182, 4
    %v1187 = vadd.f32 %v1182, %v1186
    %v1188 = vrot.slane %v1187, 2
    %v1189 = vadd.f32 %v1187, %v1188
    %v1190 = vrot.slane %v1189, 1
    %v1191 = vadd.f32 %v1189, %v1190
    %v1192 = vrot.slane %v1183, 4
    %v1193 = vadd.f32 %v1183, %v1192
    %v1194 = vrot.slane %v1193, 2
    %v1195 = vadd.f32 %v1193, %v1194
    %v1196 = vrot.slane %v1195, 1
    %v1197 = vadd.f32 %v1195, %v1196
    %v1198 = vrot.slane %v1184, 4
    %v1199 = vadd.f32 %v1184, %v1198
    %v1200 = vrot.slane %v1199, 2
    %v1201 = vadd.f32 %v1199, %v1200
    %v1202 = vrot.slane %v1201, 1
    %v1203 = vadd.f32 %v1201, %v1202
    %v1204 = vrot.slane %v1185, 4
    %v1205 = vadd.f32 %v1185, %v1204
    %v1206 = vrot.slane %v1205, 2
    %v1207 = vadd.f32 %v1205, %v1206
    %v1208 = vrot.slane %v1207, 1
    %v1209 = vadd.f32 %v1207, %v1208
    %v1210 = vmul.f32 %v1191, %v166
    %v1211 = vmul.f32 %v1197, %v167
    %v1212 = vmul.f32 %v1203, %v168
    %v1213 = vmul.f32 %v1209, %v169
    %v1214 = vadd.f32 %v1210, %v1211
    %v1215 = vadd.f32 %v1214, %v1212
    %v1216 = vadd.f32 %v1215, %v1213
    %1217 = vadd.xlane.f32.xlu0 %v1216
    %v1218 = vpop.xlane.xlu0 %1217
    %v1219 = vmul.f32 %v1218, %v479
    %v1220 = vadd.f32 %v1219, 1e-05
    %v1221 = vrsqrt.pop %v1220
    %v1222 = vmul.f32 %v1221, %v166
    %v1223 = vmul.f32 %v1221, %v167
    %v1224 = vmul.f32 %v1221, %v168
    %v1225 = vmul.f32 %v1221, %v169
    %v1226 = vadd.f32 %v1222, 0.0
    %v1227 = vadd.f32 %v1223, 0.0
    %v1228 = vadd.f32 %v1224, 0.0
    %v1229 = vadd.f32 %v1225, 0.0
    %v1230 = vmul.f32 %v1191, %v178
    %v1231 = vmul.f32 %v1197, %v179
    %v1232 = vmul.f32 %v1203, %v180
    %v1233 = vmul.f32 %v1209, %v181
    %v1234 = vadd.f32 %v1230, %v1231
    %v1235 = vadd.f32 %v1234, %v1232
    %v1236 = vadd.f32 %v1235, %v1233
    %1237 = vadd.xlane.f32.xlu0 %v1236
    %v1238 = vpop.xlane.xlu0 %1237
    %v1239 = vmul.f32 %v1238, %v479
    %v1240 = vadd.f32 %v1239, 1e-05
    %v1241 = vrsqrt.pop %v1240
    %v1242 = vmul.f32 %v1241, %v178
    %v1243 = vmul.f32 %v1241, %v179
    %v1244 = vmul.f32 %v1241, %v180
    %v1245 = vmul.f32 %v1241, %v181
    %v1246 = vadd.f32 %v1226, %v1242
    %v1247 = vadd.f32 %v1227, %v1243
    %v1248 = vadd.f32 %v1228, %v1244
    %v1249 = vadd.f32 %v1229, %v1245
    %1251 = vset.pattern.permute.xlu0 0
    %1252 = vperm.xlu0 %1251, %v1116
    %v1253 = vpop.permute.xlu0 %1252
    %v1255 = vmul.f32 %v1246, %v1253
    %v1256 = vmul.f32 %v1247, %v1253
    %v1257 = vmul.f32 %v1248, %v1253
    %v1258 = vmul.f32 %v1249, %v1253
    %v1259 = vmul.f32 %v1178, %v1255
    %v1260 = vmul.f32 %v1179, %v1256
    %v1261 = vmul.f32 %v1180, %v1257
    %v1262 = vmul.f32 %v1181, %v1258
    %1264 = vset.pattern.permute.xlu0 0
    %1265 = vperm.xlu0 %1264, %v1117
    %v1266 = vpop.permute.xlu0 %1265
    %v1268 = vadd.f32 %v1259, %v1266
    %v1269 = vadd.f32 %v1260, %v1266
    %v1270 = vadd.f32 %v1261, %v1266
    %v1271 = vadd.f32 %v1262, %v1266
    %v1272 = vadd.f32 %v1003, %v1268
    %v1273 = vadd.f32 %v1004, %v1269
    %v1274 = vadd.f32 %v1005, %v1270
    %v1275 = vadd.f32 %v1006, %v1271
    %v1276 = vmul.f32 %v1272, 0.5
    %v1277 = vmul.f32 %v1273, 0.5
    %v1278 = vmul.f32 %v1274, 0.5
    %v1279 = vmul.f32 %v1275, 0.5
    %v1280 = vmul.f32 %v1272, 0.70710677
    %v1281 = vmul.f32 %v1273, 0.70710677
    %v1282 = vmul.f32 %v1274, 0.70710677
    %v1283 = vmul.f32 %v1275, 0.70710677
    %v1284 = vand.u32 2147483647, %v1280
    %v1285 = vand.u32 2147483647, %v1281
    %v1286 = vand.u32 2147483647, %v1282
    %v1287 = vand.u32 2147483647, %v1283
    %v1288 = vmul.f32 %v1284, 0.3275911
    %v1289 = vmul.f32 %v1285, 0.3275911
    %v1290 = vmul.f32 %v1286, 0.3275911
    %v1291 = vmul.f32 %v1287, 0.3275911
    %v1292 = vadd.f32 %v1288, 1.0
    %v1293 = vadd.f32 %v1289, 1.0
    %v1294 = vadd.f32 %v1290, 1.0
    %v1295 = vadd.f32 %v1291, 1.0
    %v1296 = vrcp.pop %v1292
    %v1297 = vmul.f32 1.0, %v1296
    %v1298 = vrcp.pop %v1293
    %v1299 = vmul.f32 1.0, %v1298
    %v1300 = vrcp.pop %v1294
    %v1301 = vmul.f32 1.0, %v1300
    %v1302 = vrcp.pop %v1295
    %v1303 = vmul.f32 1.0, %v1302
    %v1304 = vmul.f32 %v1297, 1.0614054
    %v1305 = vmul.f32 %v1299, 1.0614054
    %v1306 = vmul.f32 %v1301, 1.0614054
    %v1307 = vmul.f32 %v1303, 1.0614054
    %v1308 = vadd.f32 %v1304, -1.4531521
    %v1309 = vadd.f32 %v1305, -1.4531521
    %v1310 = vadd.f32 %v1306, -1.4531521
    %v1311 = vadd.f32 %v1307, -1.4531521
    %v1312 = vmul.f32 %v1308, %v1297
    %v1313 = vmul.f32 %v1309, %v1299
    %v1314 = vmul.f32 %v1310, %v1301
    %v1315 = vmul.f32 %v1311, %v1303
    %v1316 = vadd.f32 %v1312, 1.4214138
    %v1317 = vadd.f32 %v1313, 1.4214138
    %v1318 = vadd.f32 %v1314, 1.4214138
    %v1319 = vadd.f32 %v1315, 1.4214138
    %v1320 = vmul.f32 %v1316, %v1297
    %v1321 = vmul.f32 %v1317, %v1299
    %v1322 = vmul.f32 %v1318, %v1301
    %v1323 = vmul.f32 %v1319, %v1303
    %v1324 = vadd.f32 %v1320, -0.28449672
    %v1325 = vadd.f32 %v1321, -0.28449672
    %v1326 = vadd.f32 %v1322, -0.28449672
    %v1327 = vadd.f32 %v1323, -0.28449672
    %v1328 = vmul.f32 %v1324, %v1297
    %v1329 = vmul.f32 %v1325, %v1299
    %v1330 = vmul.f32 %v1326, %v1301
    %v1331 = vmul.f32 %v1327, %v1303
    %v1332 = vadd.f32 %v1328, 0.2548296
    %v1333 = vadd.f32 %v1329, 0.2548296
    %v1334 = vadd.f32 %v1330, 0.2548296
    %v1335 = vadd.f32 %v1331, 0.2548296
    %v1336 = vmul.f32 %v1332, %v1297
    %v1337 = vmul.f32 %v1333, %v1299
    %v1338 = vmul.f32 %v1334, %v1301
    %v1339 = vmul.f32 %v1335, %v1303
    %v1340 = vsub.f32 0.0, %v1284
    %v1341 = vsub.f32 0.0, %v1285
    %v1342 = vsub.f32 0.0, %v1286
    %v1343 = vsub.f32 0.0, %v1287
    %v1344 = vmul.f32 %v1340, %v1284
    %v1345 = vmul.f32 %v1341, %v1285
    %v1346 = vmul.f32 %v1342, %v1286
    %v1347 = vmul.f32 %v1343, %v1287
    %v1348 = vmul.f32 %v1344, 1.442695
    %v1349 = vpow.pop %v1348
    %v1350 = vmul.f32 %v1345, 1.442695
    %v1351 = vpow.pop %v1350
    %v1352 = vmul.f32 %v1346, 1.442695
    %v1353 = vpow.pop %v1352
    %v1354 = vmul.f32 %v1347, 1.442695
    %v1355 = vpow.pop %v1354
    %v1356 = vmul.f32 %v1336, %v1349
    %v1357 = vmul.f32 %v1337, %v1351
    %v1358 = vmul.f32 %v1338, %v1353
    %v1359 = vmul.f32 %v1339, %v1355
    %v1360 = vsub.f32 1.0, %v1356
    %v1361 = vsub.f32 1.0, %v1357
    %v1362 = vsub.f32 1.0, %v1358
    %v1363 = vsub.f32 1.0, %v1359
    %vm1364 = vcmp.ge.f32.partialorder %v1280, 0.0
    %vm1365 = vcmp.ge.f32.partialorder %v1281, 0.0
    %vm1366 = vcmp.ge.f32.partialorder %v1282, 0.0
    %vm1367 = vcmp.ge.f32.partialorder %v1283, 0.0
    %v1368 = vsub.f32 0.0, %v1360
    %v1369 = vsub.f32 0.0, %v1361
    %v1370 = vsub.f32 0.0, %v1362
    %v1371 = vsub.f32 0.0, %v1363
    %v1372 = vsel %vm1364, %v1360, %v1368
    %v1373 = vsel %vm1365, %v1361, %v1369
    %v1374 = vsel %vm1366, %v1362, %v1370
    %v1375 = vsel %vm1367, %v1363, %v1371
    %v1376 = vadd.f32 %v1372, 1.0
    %v1377 = vadd.f32 %v1373, 1.0
    %v1378 = vadd.f32 %v1374, 1.0
    %v1379 = vadd.f32 %v1375, 1.0
    %v1380 = vmul.f32 %v1276, %v1376
    %v1381 = vmul.f32 %v1277, %v1377
    %v1382 = vmul.f32 %v1278, %v1378
    %v1383 = vmul.f32 %v1279, %v1379
    %1384 = vst [vmem:[#allocation2] sm:$0xff] %v1380
    %1385 = vst [vmem:[#allocation2 + $0x8] sm:$0xff] %v1381
    %1386 = vst [vmem:[#allocation2 + $0x10] sm:$0xff] %v1382
    %1387 = vst [vmem:[#allocation2 + $0x18] sm:$0xff] %v1383
    // Predicated region
    $region42: #{tpu_custom_call.1} parent=1 // pred_check
      _
    $region43: #{tpu_custom_call.1} parent=1 // pred_check_branch
      %1389 = sbr.rel (0) target = $region45
    $region44: #{tpu_custom_call.1} parent=1 // pred_region
      %s1391 = ssub.s32 512, 512
      %1392 = vsyncadd [#allocation3], %s1391
      %s1394 = sshll.u32 [#allocation2], 4
      %s1395 = int_to_ptr.vmem [resolvable:$true] %s1394
      %1397 = dma.vmem_to_hbm [thread:$0]  %s1395, 512, %s10, [#allocation3]
    $region45: #{tpu_custom_call.1} parent=1 // pred_fallthru
      _
    // Predicated region
    $region46: #{tpu_custom_call.1} parent=1 // pred_check
      _
    $region47: #{tpu_custom_call.1} parent=1 // pred_check_branch
      %1399 = sbr.rel (0) target = $region49
    $region48: #{tpu_custom_call.1} parent=1 // pred_region
      %1400 = dma.done [#allocation3], 512
    $region49: #{tpu_custom_call.1} parent=1 // pred_fallthru
      _
    %1401 = vsyncpa [#allocation3], 1

</llo_original>
